<compile_context>
chip_gen: v7x
topology: tpu7x:2x2x1
jax: 0.10.0
libtpu: 0.0.40
codegen_flags: <defaults>
</compile_context>

<pallas_src>
import functools

import jax
import jax.numpy as jnp
from jax.experimental import pallas as pl
from jax.experimental.pallas import tpu as pltpu


def _dd_kernel(
    x_ref, md_ref,                         # activations: [Cin_p, W], [1, 4W]
    w1_ref, b1_ref, w2_ref, b2_ref,        # conv_1 / conv_2
    durw_ref, durb_ref,                    # dur_proj (1x1)
    p1x_ref, p1d_ref, p1b_ref,             # pre_out_conv_1 split into x-half / dur-half
    wf_ref, bi_ref, bo_ref,                # pre_out_conv_2 folded with Linear(F,1) + out_b
    out_ref,                               # [1, 2W] stacked probabilities (r | hat)
    col1_ref, col2_ref, cx2_ref,           # VMEM scratches
    *, cin, filt, kernel_size, width, mxu_dtype,
):
    K = kernel_size
    pad = K // 2
    W = width
    f32 = jnp.float32

    def conv(h, w_ref, C, col):
        """K-tap 'same' Conv1d as ONE [Cout, K*C] @ [K*C, n] MXU matmul.

        `h` is always pre-multiplied by the zero-padded mask and the wrapper
        guarantees >= K//2 zero lanes at the end of every per-batch/per-branch
        time block, so cyclic pltpu.roll reproduces torch's zero padding
        exactly -- no per-tap iota/where masking needed.
        """
        hb = h.astype(mxu_dtype)
        n = h.shape[1]
        for k in range(K):
            d = k - pad                                   # static tap offset
            if d == 0:
                col[k * C:(k + 1) * C, :] = hb
            else:
                col[k * C:(k + 1) * C, :] = pltpu.roll(hb, shift=(-d) % n, axis=1)
        return jnp.dot(w_ref[...], col[0:K * C, :], preferred_element_type=f32)

    # merged small-input slab: [mask | mask | dur_r | dur_hat]
    mask1 = md_ref[:, 0:W].astype(f32)                    # [1, W]
    mask2 = md_ref[:, 0:2 * W].astype(f32)                # [1, 2W]
    dur2 = md_ref[:, 2 * W:4 * W].astype(f32)             # [1, 2W]

    # ---- trunk: conv_1 -> conv_2 (shared by both duration branches) --------
    xm = x_ref[...].astype(f32) * mask1                   # [Cin, W]
    h1 = conv(xm, w1_ref, cin, col1_ref) + b1_ref[...]    # [F, W]
    h2m = (conv(h1 * mask1, w2_ref, filt, col1_ref) + b2_ref[...]) * mask1

    # x-half of pre_out_conv_1 (torch.cat([x, dur], 1) is never materialized);
    # computed ONCE, lane-tiled for both duration branches.
    cx = conv(h2m, p1x_ref, filt, col1_ref)               # [F, W]
    cx2_ref[:, 0:W] = cx
    cx2_ref[:, W:2 * W] = cx

    # ---- both duration branches at once, stacked along lanes ---------------
    dfeat = durw_ref[...] * dur2 + durb_ref[...]          # dur_proj (1x1) -> [F, 2W]
    cd = conv(dfeat * mask2, p1d_ref, filt, col2_ref) + p1b_ref[...]
    p1m = (cx2_ref[...] + cd) * mask2                     # pre_out_conv_1 output * mask

    # pre_out_conv_2 folded with Linear(F,1):
    #   logits = (conv(p1m, out_w @ pre2_w) + out_w @ pre2_b) * mask + out_b
    logits = (conv(p1m, wf_ref, filt, col2_ref) + bi_ref[...]) * mask2 + bo_ref[...]
    out_ref[...] = jax.nn.sigmoid(logits)


def duration_discriminator_forward(x, x_mask, dur_r, dur_hat, params, *,
                                   kernel_size, mxu_dtype=jnp.bfloat16,
                                   batch_block=None):
    """DurationDiscriminatorV1.forward (g=None). Returns [prob_r, prob_hat], float32 [B, T, 1]."""
    B, Cin, T = x.shape
    F = params["conv1_w"].shape[0]
    K = kernel_size
    pad = K // 2
    assert K % 2 == 1, "only odd kernel_size ('same' conv) is supported"

    itm = jnp.dtype(mxu_dtype).itemsize
    sub = 8 * (4 // itm)                       # sublane packing granularity of mxu_dtype
    assert F % sub == 0, "filter_channels must be a multiple of the sublane packing"
    Cin_p = -(-Cin // sub) * sub

    # Lane-dense time axis with >= K//2 guaranteed zero (masked) tail lanes per
    # block, so cyclic rolls in the kernel reproduce torch zero padding exactly.
    Tp = ((T + pad + 127) // 128) * 128

    # ---- batch blocking: fold `nb` batch elements into the lane axis -------
    per_batch = Tp * (K * max(Cin_p, F) * itm              # col1 scratch
                      + 2 * K * F * itm                    # col2 scratch
                      + 2 * Cin_p * 4                      # x block (double-buffered)
                      + 16 * 4                             # md + out blocks
                      + 14 * F * 4)                        # live f32 activation slabs
    if batch_block is None:
        budget = 24 << 20                      # headroom inside v7x's 64 MiB VMEM
        nb = max(1, min(B, budget // max(per_batch, 1)))
        if B > 1:
            nb = min(nb, (B + 1) // 2)         # keep grid >= 2 for v7x's two TCs
    else:
        nb = int(batch_block)
    G = -(-B // nb)                            # grid size
    Bp = G * nb
    W = nb * Tp

    # ---- activations: pad + fold batch into lanes ---------------------------
    def pad_bct(a, cp):
        return jnp.pad(a, ((0, Bp - B), (0, cp - a.shape[1]), (0, Tp - T)))

    x2 = (pad_bct(x, Cin_p).reshape(G, nb, Cin_p, Tp)
          .transpose(0, 2, 1, 3).reshape(G, Cin_p, W))
    ml = pad_bct(x_mask, 1)[:, 0, :].reshape(G, W)
    dr = pad_bct(dur_r, 1)[:, 0, :].reshape(G, W)
    dh = pad_bct(dur_hat, 1)[:, 0, :].reshape(G, W)
    # one merged small-input slab per grid step: [mask | mask | dur_r | dur_hat]
    md = jnp.concatenate([ml, ml, dr, dh], axis=-1)[:, None, :]     # [G, 1, 4W]

    # ---- weights -------------------------------------------------------------
    def flat(w, cin_pad=None):
        # torch Conv1d weight [Cout, Cin, K] -> [Cout, K*Cin], rows match im2col k*Cin + c.
        cout, c, k = w.shape
        if cin_pad is not None and cin_pad != c:
            w = jnp.pad(w, ((0, 0), (0, cin_pad - c), (0, 0)))
            c = cin_pad
        return jnp.transpose(w, (0, 2, 1)).reshape(cout, k * c)

    colv = lambda b: b.reshape(-1, 1).astype(jnp.float32)
    mw = lambda a: a.astype(mxu_dtype)

    out_w = params["out_w"].reshape(1, F).astype(jnp.float32)
    # Fold Linear(F,1) + out_b into pre_out_conv_2 (exact: mask is a per-step scalar).
    wf = out_w @ flat(params["pre2_w"])                    # [1, K*F]
    bi = out_w @ params["pre2_b"].reshape(F, 1)            # [1, 1]
    bo = params["out_b"].reshape(1, 1).astype(jnp.float32)

    weights = [
        mw(flat(params["conv1_w"], Cin_p)), colv(params["conv1_b"]),
        mw(flat(params["conv2_w"])),        colv(params["conv2_b"]),
        params["durp_w"].reshape(F, 1).astype(jnp.float32), colv(params["durp_b"]),
        mw(flat(params["pre1_w"][:, :F, :])),               # x-half of the cat conv
        mw(flat(params["pre1_w"][:, F:, :])),               # dur-half of the cat conv
        colv(params["pre1_b"]),
        mw(wf), bi, bo,
    ]

    weight_bytes = sum(int(a.size) * jnp.dtype(a.dtype).itemsize for a in weights)
    vmem_limit = int(min(64 << 20, max(32 << 20, 2 * (per_batch * nb + 2 * weight_bytes))))

    kernel = functools.partial(_dd_kernel, cin=Cin_p, filt=F, kernel_size=K,
                               width=W, mxu_dtype=mxu_dtype)
    wspec = lambda a: pl.BlockSpec(a.shape, lambda g: (0, 0))

    out = pl.pallas_call(
        kernel,
        out_shape=jax.ShapeDtypeStruct((G, 1, 2 * W), jnp.float32),
        grid=(G,),
        in_specs=[pl.BlockSpec((None, Cin_p, W), lambda g: (g, 0, 0)),
                  pl.BlockSpec((None, 1, 4 * W), lambda g: (g, 0, 0))]
                 + [wspec(a) for a in weights],
        out_specs=pl.BlockSpec((None, 1, 2 * W), lambda g: (g, 0, 0)),
        scratch_shapes=[pltpu.VMEM((K * max(Cin_p, F), W), mxu_dtype),     # trunk im2col
                        pltpu.VMEM((K * F, 2 * W), mxu_dtype),             # branch im2col
                        pltpu.VMEM((F, 2 * W), jnp.float32)],              # tiled x-half
        compiler_params=pltpu.CompilerParams(
            dimension_semantics=("parallel",),
            vmem_limit_bytes=vmem_limit),
    )(x2, md, *weights)

    # [G, 1, 2W] -> per-branch [B, T, 1]
    pr = out[:, 0, :].reshape(G, 2, nb, Tp).transpose(1, 0, 2, 3).reshape(2, Bp, Tp)
    pr = pr[:, :B, :T]
    return [pr[0][..., None], pr[1][..., None]]


# ----------------------------- pure-JAX reference -----------------------------

def _conv1d_ref(x, w, b, pad):
    y = jax.lax.conv_general_dilated(
        x, w, window_strides=(1,), padding=[(pad, pad)],
        dimension_numbers=("NCH", "OIH", "NCH"))
    return y + b[None, :, None]


def reference_forward(x, x_mask, dur_r, dur_hat, p, *, kernel_size):
    pad = kernel_size // 2
    h = _conv1d_ref(x * x_mask, p["conv1_w"], p["conv1_b"], pad)
    h = _conv1d_ref(h * x_mask, p["conv2_w"], p["conv2_b"], pad)
    outs = []
    for dur in (dur_r, dur_hat):
        d = _conv1d_ref(dur, p["durp_w"], p["durp_b"], 0)
        z = jnp.concatenate([h, d], axis=1)
        z = _conv1d_ref(z * x_mask, p["pre1_w"], p["pre1_b"], pad)
        z = _conv1d_ref(z * x_mask, p["pre2_w"], p["pre2_b"], pad)
        z = (z * x_mask).transpose(0, 2, 1)                # [B, T, F]
        logits = z @ p["out_w"].T + p["out_b"]             # [B, T, 1]
        outs.append(jax.nn.sigmoid(logits))
    return outs


def make_params(key, in_channels, filter_channels, kernel_size):
    Fc, K = filter_channels, kernel_size
    ks = jax.random.split(key, 12)
    n = lambda k, shape: 0.15 * jax.random.normal(k, shape, jnp.float32)
    return dict(
        conv1_w=n(ks[0], (Fc, in_channels, K)), conv1_b=n(ks[1], (Fc,)),
        conv2_w=n(ks[2], (Fc, Fc, K)),          conv2_b=n(ks[3], (Fc,)),
        durp_w=n(ks[4], (Fc, 1, 1)),            durp_b=n(ks[5], (Fc,)),
        pre1_w=n(ks[6], (Fc, 2 * Fc, K)),       pre1_b=n(ks[7], (Fc,)),
        pre2_w=n(ks[8], (Fc, Fc, K)),           pre2_b=n(ks[9], (Fc,)),
        out_w=n(ks[10], (1, Fc)),               out_b=n(ks[11], (1,)),
    )


if __name__ == "__main__":
    # DurationDiscriminatorV1(in_channels=4, filter_channels=32, kernel_size=3, p_dropout=0)
    in_channels, filter_channels, kernel_size = 4, 32, 3
    key = jax.random.PRNGKey(0)
    kp, kd = jax.random.split(key)
    params = make_params(kp, in_channels, filter_channels, kernel_size)

    # case 1: exact f32 MXU path, auto batch blocking (nb=1 -> grid=2).
    # case 2: bf16-at-the-dot + batch folding (nb=2, B=3 padded to 4, grid=2).
    cases = [
        dict(B=2, T=64, mxu=jnp.float32,  nb=None, tol=1e-3),
        dict(B=3, T=48, mxu=jnp.bfloat16, nb=2,    tol=2e-2),
    ]
    for c in cases:
        B, T = c["B"], c["T"]
        kx, kr, kh, km = jax.random.split(jax.random.fold_in(kd, B), 4)
        x = jax.random.normal(kx, (B, in_channels, T), jnp.float32)
        lengths = jax.random.randint(km, (B,), T // 2, T + 1).at[0].set(T)
        x_mask = (jnp.arange(T)[None, :] < lengths[:, None]).astype(jnp.float32)[:, None, :]
        dur_r = jnp.abs(jax.random.normal(kr, (B, 1, T), jnp.float32))
        dur_hat = jnp.abs(jax.random.normal(kh, (B, 1, T), jnp.float32))

        probs = duration_discriminator_forward(
            x, x_mask, dur_r, dur_hat, params, kernel_size=kernel_size,
            mxu_dtype=c["mxu"], batch_block=c["nb"])
        probs = jax.block_until_ready(probs)

        refs = reference_forward(x, x_mask, dur_r, dur_hat, params,
                                 kernel_size=kernel_size)
        for got, ref in zip(probs, refs):
            assert got.shape == (B, T, 1) and got.dtype == jnp.float32
            assert bool(jnp.all(jnp.isfinite(got)))
            err = float(jnp.max(jnp.abs(got - ref)))
            assert err < c["tol"], (c, err)

    print("KERNEL_OK")
</pallas_src>

<mosaic_0001>
module attributes {stable_mosaic.version = 11 : i64} {
  func.func @_dd_kernel(%arg0: i32, %arg1: memref<1x8x128xf32, #tpu.memory_space<vmem>>, %arg2: memref<1x1x512xf32, #tpu.memory_space<vmem>>, %arg3: memref<32x24xf32, #tpu.memory_space<vmem>>, %arg4: memref<32x1xf32, #tpu.memory_space<vmem>>, %arg5: memref<32x96xf32, #tpu.memory_space<vmem>>, %arg6: memref<32x1xf32, #tpu.memory_space<vmem>>, %arg7: memref<32x1xf32, #tpu.memory_space<vmem>>, %arg8: memref<32x1xf32, #tpu.memory_space<vmem>>, %arg9: memref<32x96xf32, #tpu.memory_space<vmem>>, %arg10: memref<32x96xf32, #tpu.memory_space<vmem>>, %arg11: memref<32x1xf32, #tpu.memory_space<vmem>>, %arg12: memref<1x96xf32, #tpu.memory_space<vmem>>, %arg13: memref<1x1xf32, #tpu.memory_space<vmem>>, %arg14: memref<1x1xf32, #tpu.memory_space<vmem>>, %arg15: memref<1x1x256xf32, #tpu.memory_space<vmem>>, %arg16: memref<96x128xf32, #tpu.memory_space<vmem>>, %arg17: memref<96x256xf32, #tpu.memory_space<vmem>>, %arg18: memref<32x256xf32, #tpu.memory_space<vmem>>) attributes {dimension_semantics = [#tpu.dimension_semantics<parallel>], iteration_bounds = array<i64: 2>, scalar_prefetch = 0 : i64, scratch_operands = 3 : i64, tpu.core_type = #tpu.core_type<tc>, window_params = [{transform_indices = @transform_0, window_bounds = array<i64: 1, 8, 128>}, {transform_indices = @transform_1, window_bounds = array<i64: 1, 1, 512>}, {pipeline_mode = #tpu.pipeline_mode<synchronous>, transform_indices = @transform_2, window_bounds = array<i64: 32, 24>}, {pipeline_mode = #tpu.pipeline_mode<synchronous>, transform_indices = @transform_3, window_bounds = array<i64: 32, 1>}, {pipeline_mode = #tpu.pipeline_mode<synchronous>, transform_indices = @transform_4, window_bounds = array<i64: 32, 96>}, {pipeline_mode = #tpu.pipeline_mode<synchronous>, transform_indices = @transform_5, window_bounds = array<i64: 32, 1>}, {pipeline_mode = #tpu.pipeline_mode<synchronous>, transform_indices = @transform_6, window_bounds = array<i64: 32, 1>}, {pipeline_mode = #tpu.pipeline_mode<synchronous>, transform_indices = @transform_7, window_bounds = array<i64: 32, 1>}, {pipeline_mode = #tpu.pipeline_mode<synchronous>, transform_indices = @transform_8, window_bounds = array<i64: 32, 96>}, {pipeline_mode = #tpu.pipeline_mode<synchronous>, transform_indices = @transform_9, window_bounds = array<i64: 32, 96>}, {pipeline_mode = #tpu.pipeline_mode<synchronous>, transform_indices = @transform_10, window_bounds = array<i64: 32, 1>}, {pipeline_mode = #tpu.pipeline_mode<synchronous>, transform_indices = @transform_11, window_bounds = array<i64: 1, 96>}, {pipeline_mode = #tpu.pipeline_mode<synchronous>, transform_indices = @transform_12, window_bounds = array<i64: 1, 1>}, {pipeline_mode = #tpu.pipeline_mode<synchronous>, transform_indices = @transform_13, window_bounds = array<i64: 1, 1>}, {transform_indices = @transform_14, window_bounds = array<i64: 1, 1, 256>}]} {
    %c0 = arith.constant 0 : index
    %c0_0 = arith.constant 0 : index
    %c0_1 = arith.constant 0 : index
    %0 = vector.load %arg2[%c0, %c0_0, %c0_1] : memref<1x1x512xf32, #tpu.memory_space<vmem>>, vector<1x1x128xf32>
    %1 = vector.shape_cast %0 : vector<1x1x128xf32> to vector<1x128xf32>
    %c0_2 = arith.constant 0 : index
    %c0_3 = arith.constant 0 : index
    %c0_4 = arith.constant 0 : index
    %2 = vector.load %arg2[%c0_2, %c0_3, %c0_4] : memref<1x1x512xf32, #tpu.memory_space<vmem>>, vector<1x1x256xf32>
    %3 = vector.shape_cast %2 : vector<1x1x256xf32> to vector<1x256xf32>
    %c0_5 = arith.constant 0 : index
    %c0_6 = arith.constant 0 : index
    %c256 = arith.constant 256 : index
    %4 = vector.load %arg2[%c0_5, %c0_6, %c256] : memref<1x1x512xf32, #tpu.memory_space<vmem>>, vector<1x1x256xf32>
    %5 = vector.shape_cast %4 : vector<1x1x256xf32> to vector<1x256xf32>
    %c0_7 = arith.constant 0 : index
    %c0_8 = arith.constant 0 : index
    %c0_9 = arith.constant 0 : index
    %6 = vector.load %arg1[%c0_7, %c0_8, %c0_9] : memref<1x8x128xf32, #tpu.memory_space<vmem>>, vector<1x8x128xf32>
    %7 = vector.shape_cast %6 : vector<1x8x128xf32> to vector<8x128xf32>
    %8 = vector.broadcast %1 : vector<1x128xf32> to vector<8x128xf32>
    %9 = arith.mulf %7, %8 : vector<8x128xf32>
    %c1_i32 = arith.constant 1 : i32
    %10 = tpu.dynamic_rotate %9 by %c1_i32 dim 1 : vector<8x128xf32>, i32 -> vector<8x128xf32>
    %c0_10 = arith.constant 0 : index
    %c0_11 = arith.constant 0 : index
    %11 = vector.load %arg16[%c0_10, %c0_11] : memref<96x128xf32, #tpu.memory_space<vmem>>, vector<8x128xf32>
    tpu.vector_store %arg16[%c0_10, %c0_11], %10 {strides = array<i32>} : memref<96x128xf32, #tpu.memory_space<vmem>>, vector<8x128xf32>,
    %c8 = arith.constant 8 : index
    %c0_12 = arith.constant 0 : index
    %12 = vector.load %arg16[%c8, %c0_12] : memref<96x128xf32, #tpu.memory_space<vmem>>, vector<8x128xf32>
    tpu.vector_store %arg16[%c8, %c0_12], %9 {strides = array<i32>} : memref<96x128xf32, #tpu.memory_space<vmem>>, vector<8x128xf32>,
    %c127_i32 = arith.constant 127 : i32
    %13 = tpu.dynamic_rotate %9 by %c127_i32 dim 1 : vector<8x128xf32>, i32 -> vector<8x128xf32>
    %c16 = arith.constant 16 : index
    %c0_13 = arith.constant 0 : index
    %14 = vector.load %arg16[%c16, %c0_13] : memref<96x128xf32, #tpu.memory_space<vmem>>, vector<8x128xf32>
    tpu.vector_store %arg16[%c16, %c0_13], %13 {strides = array<i32>} : memref<96x128xf32, #tpu.memory_space<vmem>>, vector<8x128xf32>,
    %c0_14 = arith.constant 0 : index
    %c0_15 = arith.constant 0 : index
    %15 = vector.load %arg3[%c0_14, %c0_15] : memref<32x24xf32, #tpu.memory_space<vmem>>, vector<32x24xf32>
    %c0_16 = arith.constant 0 : index
    %c0_17 = arith.constant 0 : index
    %16 = vector.load %arg16[%c0_16, %c0_17] : memref<96x128xf32, #tpu.memory_space<vmem>>, vector<24x128xf32>
    %cst = arith.constant dense<0.000000e+00> : vector<32x128xf32>
    %17 = tpu.matmul %15, %16, %cst {dimension_numbers = #tpu.dot_dimension_numbers<[1], [0], [0], [1], [0, 0, 1, 1], [], []>} : vector<32x24xf32>, vector<24x128xf32>, vector<32x128xf32> -> vector<32x128xf32>
    %c0_18 = arith.constant 0 : index
    %c0_19 = arith.constant 0 : index
    %18 = vector.load %arg4[%c0_18, %c0_19] : memref<32x1xf32, #tpu.memory_space<vmem>>, vector<32x1xf32>
    %19 = vector.broadcast %18 : vector<32x1xf32> to vector<32x128xf32>
    %20 = arith.addf %17, %19 : vector<32x128xf32>
    %21 = vector.broadcast %1 : vector<1x128xf32> to vector<32x128xf32>
    %22 = arith.mulf %20, %21 : vector<32x128xf32>
    %c1_i32_20 = arith.constant 1 : i32
    %23 = tpu.dynamic_rotate %22 by %c1_i32_20 dim 1 : vector<32x128xf32>, i32 -> vector<32x128xf32>
    %c0_21 = arith.constant 0 : index
    %c0_22 = arith.constant 0 : index
    %24 = vector.load %arg16[%c0_21, %c0_22] : memref<96x128xf32, #tpu.memory_space<vmem>>, vector<32x128xf32>
    tpu.vector_store %arg16[%c0_21, %c0_22], %23 {strides = array<i32>} : memref<96x128xf32, #tpu.memory_space<vmem>>, vector<32x128xf32>,
    %c32 = arith.constant 32 : index
    %c0_23 = arith.constant 0 : index
    %25 = vector.load %arg16[%c32, %c0_23] : memref<96x128xf32, #tpu.memory_space<vmem>>, vector<32x128xf32>
    tpu.vector_store %arg16[%c32, %c0_23], %22 {strides = array<i32>} : memref<96x128xf32, #tpu.memory_space<vmem>>, vector<32x128xf32>,
    %c127_i32_24 = arith.constant 127 : i32
    %26 = tpu.dynamic_rotate %22 by %c127_i32_24 dim 1 : vector<32x128xf32>, i32 -> vector<32x128xf32>
    %c64 = arith.constant 64 : index
    %c0_25 = arith.constant 0 : index
    %27 = vector.load %arg16[%c64, %c0_25] : memref<96x128xf32, #tpu.memory_space<vmem>>, vector<32x128xf32>
    tpu.vector_store %arg16[%c64, %c0_25], %26 {strides = array<i32>} : memref<96x128xf32, #tpu.memory_space<vmem>>, vector<32x128xf32>,
    %c0_26 = arith.constant 0 : index
    %c0_27 = arith.constant 0 : index
    %28 = vector.load %arg5[%c0_26, %c0_27] : memref<32x96xf32, #tpu.memory_space<vmem>>, vector<32x96xf32>
    %c0_28 = arith.constant 0 : index
    %c0_29 = arith.constant 0 : index
    %29 = vector.load %arg16[%c0_28, %c0_29] : memref<96x128xf32, #tpu.memory_space<vmem>>, vector<96x128xf32>
    %cst_30 = arith.constant dense<0.000000e+00> : vector<32x128xf32>
    %30 = tpu.matmul %28, %29, %cst_30 {dimension_numbers = #tpu.dot_dimension_numbers<[1], [0], [0], [1], [0, 0, 1, 1], [], []>} : vector<32x96xf32>, vector<96x128xf32>, vector<32x128xf32> -> vector<32x128xf32>
    %c0_31 = arith.constant 0 : index
    %c0_32 = arith.constant 0 : index
    %31 = vector.load %arg6[%c0_31, %c0_32] : memref<32x1xf32, #tpu.memory_space<vmem>>, vector<32x1xf32>
    %32 = vector.broadcast %31 : vector<32x1xf32> to vector<32x128xf32>
    %33 = arith.addf %30, %32 : vector<32x128xf32>
    %34 = vector.broadcast %1 : vector<1x128xf32> to vector<32x128xf32>
    %35 = arith.mulf %33, %34 : vector<32x128xf32>
    %c1_i32_33 = arith.constant 1 : i32
    %36 = tpu.dynamic_rotate %35 by %c1_i32_33 dim 1 : vector<32x128xf32>, i32 -> vector<32x128xf32>
    %c0_34 = arith.constant 0 : index
    %c0_35 = arith.constant 0 : index
    %37 = vector.load %arg16[%c0_34, %c0_35] : memref<96x128xf32, #tpu.memory_space<vmem>>, vector<32x128xf32>
    tpu.vector_store %arg16[%c0_34, %c0_35], %36 {strides = array<i32>} : memref<96x128xf32, #tpu.memory_space<vmem>>, vector<32x128xf32>,
    %c32_36 = arith.constant 32 : index
    %c0_37 = arith.constant 0 : index
    %38 = vector.load %arg16[%c32_36, %c0_37] : memref<96x128xf32, #tpu.memory_space<vmem>>, vector<32x128xf32>
    tpu.vector_store %arg16[%c32_36, %c0_37], %35 {strides = array<i32>} : memref<96x128xf32, #tpu.memory_space<vmem>>, vector<32x128xf32>,
    %c127_i32_38 = arith.constant 127 : i32
    %39 = tpu.dynamic_rotate %35 by %c127_i32_38 dim 1 : vector<32x128xf32>, i32 -> vector<32x128xf32>
    %c64_39 = arith.constant 64 : index
    %c0_40 = arith.constant 0 : index
    %40 = vector.load %arg16[%c64_39, %c0_40] : memref<96x128xf32, #tpu.memory_space<vmem>>, vector<32x128xf32>
    tpu.vector_store %arg16[%c64_39, %c0_40], %39 {strides = array<i32>} : memref<96x128xf32, #tpu.memory_space<vmem>>, vector<32x128xf32>,
    %c0_41 = arith.constant 0 : index
    %c0_42 = arith.constant 0 : index
    %41 = vector.load %arg9[%c0_41, %c0_42] : memref<32x96xf32, #tpu.memory_space<vmem>>, vector<32x96xf32>
    %c0_43 = arith.constant 0 : index
    %c0_44 = arith.constant 0 : index
    %42 = vector.load %arg16[%c0_43, %c0_44] : memref<96x128xf32, #tpu.memory_space<vmem>>, vector<96x128xf32>
    %cst_45 = arith.constant dense<0.000000e+00> : vector<32x128xf32>
    %43 = tpu.matmul %41, %42, %cst_45 {dimension_numbers = #tpu.dot_dimension_numbers<[1], [0], [0], [1], [0, 0, 1, 1], [], []>} : vector<32x96xf32>, vector<96x128xf32>, vector<32x128xf32> -> vector<32x128xf32>
    %c0_46 = arith.constant 0 : index
    %c0_47 = arith.constant 0 : index
    %44 = vector.load %arg18[%c0_46, %c0_47] : memref<32x256xf32, #tpu.memory_space<vmem>>, vector<32x128xf32>
    tpu.vector_store %arg18[%c0_46, %c0_47], %43 {strides = array<i32>} : memref<32x256xf32, #tpu.memory_space<vmem>>, vector<32x128xf32>,
    %c0_48 = arith.constant 0 : index
    %c128 = arith.constant 128 : index
    %45 = vector.load %arg18[%c0_48, %c128] : memref<32x256xf32, #tpu.memory_space<vmem>>, vector<32x128xf32>
    tpu.vector_store %arg18[%c0_48, %c128], %43 {strides = array<i32>} : memref<32x256xf32, #tpu.memory_space<vmem>>, vector<32x128xf32>,
    %c0_49 = arith.constant 0 : index
    %c0_50 = arith.constant 0 : index
    %46 = vector.load %arg7[%c0_49, %c0_50] : memref<32x1xf32, #tpu.memory_space<vmem>>, vector<32x1xf32>
    %47 = vector.broadcast %46 : vector<32x1xf32> to vector<32x256xf32>
    %48 = vector.broadcast %5 : vector<1x256xf32> to vector<32x256xf32>
    %49 = arith.mulf %47, %48 : vector<32x256xf32>
    %c0_51 = arith.constant 0 : index
    %c0_52 = arith.constant 0 : index
    %50 = vector.load %arg8[%c0_51, %c0_52] : memref<32x1xf32, #tpu.memory_space<vmem>>, vector<32x1xf32>
    %51 = vector.broadcast %50 : vector<32x1xf32> to vector<32x256xf32>
    %52 = arith.addf %49, %51 : vector<32x256xf32>
    %53 = vector.broadcast %3 : vector<1x256xf32> to vector<32x256xf32>
    %54 = arith.mulf %52, %53 : vector<32x256xf32>
    %c1_i32_53 = arith.constant 1 : i32
    %55 = tpu.dynamic_rotate %54 by %c1_i32_53 dim 1 : vector<32x256xf32>, i32 -> vector<32x256xf32>
    %c0_54 = arith.constant 0 : index
    %c0_55 = arith.constant 0 : index
    %56 = vector.load %arg17[%c0_54, %c0_55] : memref<96x256xf32, #tpu.memory_space<vmem>>, vector<32x256xf32>
    tpu.vector_store %arg17[%c0_54, %c0_55], %55 {strides = array<i32>} : memref<96x256xf32, #tpu.memory_space<vmem>>, vector<32x256xf32>,
    %c32_56 = arith.constant 32 : index
    %c0_57 = arith.constant 0 : index
    %57 = vector.load %arg17[%c32_56, %c0_57] : memref<96x256xf32, #tpu.memory_space<vmem>>, vector<32x256xf32>
    tpu.vector_store %arg17[%c32_56, %c0_57], %54 {strides = array<i32>} : memref<96x256xf32, #tpu.memory_space<vmem>>, vector<32x256xf32>,
    %c255_i32 = arith.constant 255 : i32
    %58 = tpu.dynamic_rotate %54 by %c255_i32 dim 1 : vector<32x256xf32>, i32 -> vector<32x256xf32>
    %c64_58 = arith.constant 64 : index
    %c0_59 = arith.constant 0 : index
    %59 = vector.load %arg17[%c64_58, %c0_59] : memref<96x256xf32, #tpu.memory_space<vmem>>, vector<32x256xf32>
    tpu.vector_store %arg17[%c64_58, %c0_59], %58 {strides = array<i32>} : memref<96x256xf32, #tpu.memory_space<vmem>>, vector<32x256xf32>,
    %c0_60 = arith.constant 0 : index
    %c0_61 = arith.constant 0 : index
    %60 = vector.load %arg10[%c0_60, %c0_61] : memref<32x96xf32, #tpu.memory_space<vmem>>, vector<32x96xf32>
    %c0_62 = arith.constant 0 : index
    %c0_63 = arith.constant 0 : index
    %61 = vector.load %arg17[%c0_62, %c0_63] : memref<96x256xf32, #tpu.memory_space<vmem>>, vector<96x256xf32>
    %cst_64 = arith.constant dense<0.000000e+00> : vector<32x256xf32>
    %62 = tpu.matmul %60, %61, %cst_64 {dimension_numbers = #tpu.dot_dimension_numbers<[1], [0], [0], [1], [0, 0, 1, 1], [], []>} : vector<32x96xf32>, vector<96x256xf32>, vector<32x256xf32> -> vector<32x256xf32>
    %c0_65 = arith.constant 0 : index
    %c0_66 = arith.constant 0 : index
    %63 = vector.load %arg11[%c0_65, %c0_66] : memref<32x1xf32, #tpu.memory_space<vmem>>, vector<32x1xf32>
    %64 = vector.broadcast %63 : vector<32x1xf32> to vector<32x256xf32>
    %65 = arith.addf %62, %64 : vector<32x256xf32>
    %c0_67 = arith.constant 0 : index
    %c0_68 = arith.constant 0 : index
    %66 = vector.load %arg18[%c0_67, %c0_68] : memref<32x256xf32, #tpu.memory_space<vmem>>, vector<32x256xf32>
    %67 = arith.addf %66, %65 : vector<32x256xf32>
    %68 = vector.broadcast %3 : vector<1x256xf32> to vector<32x256xf32>
    %69 = arith.mulf %67, %68 : vector<32x256xf32>
    %c1_i32_69 = arith.constant 1 : i32
    %70 = tpu.dynamic_rotate %69 by %c1_i32_69 dim 1 : vector<32x256xf32>, i32 -> vector<32x256xf32>
    %c0_70 = arith.constant 0 : index
    %c0_71 = arith.constant 0 : index
    %71 = vector.load %arg17[%c0_70, %c0_71] : memref<96x256xf32, #tpu.memory_space<vmem>>, vector<32x256xf32>
    tpu.vector_store %arg17[%c0_70, %c0_71], %70 {strides = array<i32>} : memref<96x256xf32, #tpu.memory_space<vmem>>, vector<32x256xf32>,
    %c32_72 = arith.constant 32 : index
    %c0_73 = arith.constant 0 : index
    %72 = vector.load %arg17[%c32_72, %c0_73] : memref<96x256xf32, #tpu.memory_space<vmem>>, vector<32x256xf32>
    tpu.vector_store %arg17[%c32_72, %c0_73], %69 {strides = array<i32>} : memref<96x256xf32, #tpu.memory_space<vmem>>, vector<32x256xf32>,
    %c255_i32_74 = arith.constant 255 : i32
    %73 = tpu.dynamic_rotate %69 by %c255_i32_74 dim 1 : vector<32x256xf32>, i32 -> vector<32x256xf32>
    %c64_75 = arith.constant 64 : index
    %c0_76 = arith.constant 0 : index
    %74 = vector.load %arg17[%c64_75, %c0_76] : memref<96x256xf32, #tpu.memory_space<vmem>>, vector<32x256xf32>
    tpu.vector_store %arg17[%c64_75, %c0_76], %73 {strides = array<i32>} : memref<96x256xf32, #tpu.memory_space<vmem>>, vector<32x256xf32>,
    %c0_77 = arith.constant 0 : index
    %c0_78 = arith.constant 0 : index
    %75 = vector.load %arg12[%c0_77, %c0_78] : memref<1x96xf32, #tpu.memory_space<vmem>>, vector<1x96xf32>
    %c0_79 = arith.constant 0 : index
    %c0_80 = arith.constant 0 : index
    %76 = vector.load %arg17[%c0_79, %c0_80] : memref<96x256xf32, #tpu.memory_space<vmem>>, vector<96x256xf32>
    %cst_81 = arith.constant dense<0.000000e+00> : vector<1x256xf32>
    %77 = tpu.matmul %75, %76, %cst_81 {dimension_numbers = #tpu.dot_dimension_numbers<[1], [0], [0], [1], [0, 0, 1, 1], [], []>} : vector<1x96xf32>, vector<96x256xf32>, vector<1x256xf32> -> vector<1x256xf32>
    %c0_82 = arith.constant 0 : index
    %c0_83 = arith.constant 0 : index
    %78 = vector.load %arg13[%c0_82, %c0_83] : memref<1x1xf32, #tpu.memory_space<vmem>>, vector<1x1xf32>
    %79 = vector.broadcast %78 : vector<1x1xf32> to vector<1x256xf32>
    %80 = arith.addf %77, %79 : vector<1x256xf32>
    %81 = arith.mulf %80, %3 : vector<1x256xf32>
    %c0_84 = arith.constant 0 : index
    %c0_85 = arith.constant 0 : index
    %82 = vector.load %arg14[%c0_84, %c0_85] : memref<1x1xf32, #tpu.memory_space<vmem>>, vector<1x1xf32>
    %83 = vector.broadcast %82 : vector<1x1xf32> to vector<1x256xf32>
    %84 = arith.addf %81, %83 : vector<1x256xf32>
    %85 = arith.negf %84 : vector<1x256xf32>
    %86 = math.exp %85 : vector<1x256xf32>
    %cst_86 = arith.constant 1.000000e+00 : f32
    %87 = vector.broadcast %cst_86 : f32 to vector<1x256xf32>
    %88 = arith.addf %87, %86 : vector<1x256xf32>
    %89 = arith.divf %87, %88 : vector<1x256xf32>
    %c0_87 = arith.constant 0 : index
    %c0_88 = arith.constant 0 : index
    %c0_89 = arith.constant 0 : index
    %90 = vector.load %arg15[%c0_87, %c0_88, %c0_89] : memref<1x1x256xf32, #tpu.memory_space<vmem>>, vector<1x1x256xf32>
    %91 = vector.shape_cast %90 : vector<1x1x256xf32> to vector<1x256xf32>
    %92 = vector.shape_cast %89 : vector<1x256xf32> to vector<1x1x256xf32>
    tpu.vector_store %arg15[%c0_87, %c0_88, %c0_89], %92 {strides = array<i32>} : memref<1x1x256xf32, #tpu.memory_space<vmem>>, vector<1x1x256xf32>,
    return
  }
  func.func @transform_0(%arg0: i32) -> (i32, i32, i32) {
    %c0_i32 = arith.constant 0 : i32
    %c0_i32_0 = arith.constant 0 : i32
    %c0_i32_1 = arith.constant 0 : i32
    return %arg0, %c0_i32, %c0_i32_0 : i32, i32, i32
  }
  func.func @transform_1(%arg0: i32) -> (i32, i32, i32) {
    %c0_i32 = arith.constant 0 : i32
    %c0_i32_0 = arith.constant 0 : i32
    %c0_i32_1 = arith.constant 0 : i32
    return %arg0, %c0_i32, %c0_i32_0 : i32, i32, i32
  }
  func.func @transform_2(%arg0: i32) -> (i32, i32) {
    %c0_i32 = arith.constant 0 : i32
    %c0_i32_0 = arith.constant 0 : i32
    %c0_i32_1 = arith.constant 0 : i32
    return %c0_i32, %c0_i32_0 : i32, i32
  }
  func.func @transform_3(%arg0: i32) -> (i32, i32) {
    %c0_i32 = arith.constant 0 : i32
    %c0_i32_0 = arith.constant 0 : i32
    %c0_i32_1 = arith.constant 0 : i32
    return %c0_i32, %c0_i32_0 : i32, i32
  }
  func.func @transform_4(%arg0: i32) -> (i32, i32) {
    %c0_i32 = arith.constant 0 : i32
    %c0_i32_0 = arith.constant 0 : i32
    %c0_i32_1 = arith.constant 0 : i32
    return %c0_i32, %c0_i32_0 : i32, i32
  }
  func.func @transform_5(%arg0: i32) -> (i32, i32) {
    %c0_i32 = arith.constant 0 : i32
    %c0_i32_0 = arith.constant 0 : i32
    %c0_i32_1 = arith.constant 0 : i32
    return %c0_i32, %c0_i32_0 : i32, i32
  }
  func.func @transform_6(%arg0: i32) -> (i32, i32) {
    %c0_i32 = arith.constant 0 : i32
    %c0_i32_0 = arith.constant 0 : i32
    %c0_i32_1 = arith.constant 0 : i32
    return %c0_i32, %c0_i32_0 : i32, i32
  }
  func.func @transform_7(%arg0: i32) -> (i32, i32) {
    %c0_i32 = arith.constant 0 : i32
    %c0_i32_0 = arith.constant 0 : i32
    %c0_i32_1 = arith.constant 0 : i32
    return %c0_i32, %c0_i32_0 : i32, i32
  }
  func.func @transform_8(%arg0: i32) -> (i32, i32) {
    %c0_i32 = arith.constant 0 : i32
    %c0_i32_0 = arith.constant 0 : i32
    %c0_i32_1 = arith.constant 0 : i32
    return %c0_i32, %c0_i32_0 : i32, i32
  }
  func.func @transform_9(%arg0: i32) -> (i32, i32) {
    %c0_i32 = arith.constant 0 : i32
    %c0_i32_0 = arith.constant 0 : i32
    %c0_i32_1 = arith.constant 0 : i32
    return %c0_i32, %c0_i32_0 : i32, i32
  }
  func.func @transform_10(%arg0: i32) -> (i32, i32) {
    %c0_i32 = arith.constant 0 : i32
    %c0_i32_0 = arith.constant 0 : i32
    %c0_i32_1 = arith.constant 0 : i32
    return %c0_i32, %c0_i32_0 : i32, i32
  }
  func.func @transform_11(%arg0: i32) -> (i32, i32) {
    %c0_i32 = arith.constant 0 : i32
    %c0_i32_0 = arith.constant 0 : i32
    %c0_i32_1 = arith.constant 0 : i32
    return %c0_i32, %c0_i32_0 : i32, i32
  }
  func.func @transform_12(%arg0: i32) -> (i32, i32) {
    %c0_i32 = arith.constant 0 : i32
    %c0_i32_0 = arith.constant 0 : i32
    %c0_i32_1 = arith.constant 0 : i32
    return %c0_i32, %c0_i32_0 : i32, i32
  }
  func.func @transform_13(%arg0: i32) -> (i32, i32) {
    %c0_i32 = arith.constant 0 : i32
    %c0_i32_0 = arith.constant 0 : i32
    %c0_i32_1 = arith.constant 0 : i32
    return %c0_i32, %c0_i32_0 : i32, i32
  }
  func.func @transform_14(%arg0: i32) -> (i32, i32, i32) {
    %c0_i32 = arith.constant 0 : i32
    %c0_i32_0 = arith.constant 0 : i32
    %c0_i32_1 = arith.constant 0 : i32
    return %arg0, %c0_i32, %c0_i32_0 : i32, i32, i32
  }
}

</mosaic_0001>

<llo_original>
// kernel: tpu_custom_call.1
$region0: #{tpu_custom_call.1}
  #allocation0 [shape = 'u32[]', space=smem, size = 0x4, offset = 0x4, fixed_abs, tag = 'smem constant byte address 0x4 - core index']
  #allocation1 [shape = 'u32[144,128]{1,0:T(1,128)}', space=vmem, size = 0x12000, scoped, tag = 'internal scratch']
  #allocation2 [shape = 'f32[96,128]{1,0:T(8,128)}', space=vmem, size = 0xc000, scoped, tag = 'scratch operand']
  #allocation3 [shape = 'f32[96,256]{1,0:T(8,128)}', space=vmem, size = 0x18000, scoped, tag = 'scratch operand']
  #allocation4 [shape = 'f32[32,256]{1,0:T(8,128)}', space=vmem, size = 0x8000, scoped, tag = 'scratch operand']
  #allocation5 [shape = 'f32[1,1]{1,0:T(1,128)S(1)}', space=vmem, size = 0x200, scoped, tag = 'scoped memory for tpu_custom_call.1']
  #allocation6 [shape = 'f32[1,1]{1,0:T(1,128)S(1)}', space=vmem, size = 0x200, scoped, tag = 'scoped memory for tpu_custom_call.1']
  %s0 = inlined_call_operand.vmem [shape: f32[2,8,128], index: 0, kind: input, shape index: {}]
  %s1 = inlined_call_operand.vmem [shape: f32[2,1,512], index: 1, kind: input, shape index: {}]
  %s2 = inlined_call_operand.vmem [shape: f32[32,24], index: 2, kind: input, shape index: {}]
  %s3 = inlined_call_operand.vmem [shape: f32[32,1], index: 3, kind: input, shape index: {}]
  %s4 = inlined_call_operand.vmem [shape: f32[32,96], index: 4, kind: input, shape index: {}]
  %s5 = inlined_call_operand.vmem [shape: f32[32,1], index: 5, kind: input, shape index: {}]
  %s6 = inlined_call_operand.vmem [shape: f32[32,1], index: 6, kind: input, shape index: {}]
  %s7 = inlined_call_operand.vmem [shape: f32[32,1], index: 7, kind: input, shape index: {}]
  %s8 = inlined_call_operand.vmem [shape: f32[32,96], index: 8, kind: input, shape index: {}]
  %s9 = inlined_call_operand.vmem [shape: f32[32,96], index: 9, kind: input, shape index: {}]
  %s10 = inlined_call_operand.vmem [shape: f32[32,1], index: 10, kind: input, shape index: {}]
  %s11 = inlined_call_operand.vmem [shape: f32[1,96], index: 11, kind: input, shape index: {}]
  %s12 = inlined_call_operand.<no memory space> [shape: f32[1,1], index: 12, kind: input, shape index: {}]
  %s13 = inlined_call_operand.<no memory space> [shape: f32[1,1], index: 13, kind: input, shape index: {}]
  %s14 = inlined_call_operand.hbm [shape: f32[2,1,256], index: 14, kind: output, shape index: {}]
  %s15 = sld [smem:[#allocation0]]
  $region89: #{tpu_custom_call.1} parent=0
    _
  %s17 = ssub.s32 1, %s15
  %s18 = scalar_select 0, %s17, %s15
  %v19 = vstv %s12
  %20 = vst [vmem:[#allocation5] sm:$0x1] %v19
  %v21 = vstv %s13
  %22 = vst [vmem:[#allocation6] sm:$0x1] %v21
  $region1: #{tpu_custom_call.1} parent=0
    #allocation7 [shape = 'u8[2048]{0}', space=vmem, size = 0x800, scoped, tag = 'output window, operand 0']
    #allocation8 [shape = 's32[2]{0}', space=sflag, size = 0x8, scoped, tag = 'scoped memory for tpu_custom_call.1']
    %23 = vsyncpa [#allocation8], 0
    %s24 = scalar_lea.sflag [#allocation8], 1
    %25 = vsyncpa %s24, 0
    loop: start=0, step=1, limit=4
    $region2: #{tpu_custom_call.1} parent=1 // loop_pre_header
      _
    $region3: #{tpu_custom_call.1} parent=1 // loop_header
      %s27 = sphi 0, %s31
      %p28 = scmp.ge.s32.totalorder %s27, 4
      %s37 = sphi 0, %s39
      %s40 = sphi 0, %s37
      %s41 = sphi 0, %s40
      %s57 = sphi 0, %s41
      %s63 = sphi 0, %s65
      %s66 = sphi 0, %s63
      %s67 = sphi 0, %s66
      %s83 = sphi 0, %s67
      %s87 = sphi 0, %s87
      %s89 = sphi 0, %s87
      %s90 = sphi 0, %s89
      %s104 = sphi 0, %s90
      %s108 = sphi 0, %s108
      %s110 = sphi 0, %s108
      %s111 = sphi 0, %s110
      %s125 = sphi 0, %s111
      %s129 = sphi 0, %s129
      %s131 = sphi 0, %s129
      %s132 = sphi 0, %s131
      %s146 = sphi 0, %s132
      %s150 = sphi 0, %s150
      %s152 = sphi 0, %s150
      %s153 = sphi 0, %s152
      %s167 = sphi 0, %s153
      %s171 = sphi 0, %s171
      %s173 = sphi 0, %s171
      %s174 = sphi 0, %s173
      %s188 = sphi 0, %s174
      %s192 = sphi 0, %s192
      %s194 = sphi 0, %s192
      %s195 = sphi 0, %s194
      %s209 = sphi 0, %s195
      %s213 = sphi 0, %s213
      %s215 = sphi 0, %s213
      %s216 = sphi 0, %s215
      %s230 = sphi 0, %s216
      %s234 = sphi 0, %s234
      %s236 = sphi 0, %s234
      %s237 = sphi 0, %s236
      %s251 = sphi 0, %s237
      %s255 = sphi 0, %s255
      %s257 = sphi 0, %s255
      %s258 = sphi 0, %s257
      %s272 = sphi 0, %s258
      %s276 = sphi 0, %s276
      %s278 = sphi 0, %s276
      %s279 = sphi 0, %s278
      %s293 = sphi 0, %s279
      %s297 = sphi 0, %s297
      %s299 = sphi 0, %s297
      %s300 = sphi 0, %s299
      %s314 = sphi 0, %s300
      %s318 = sphi 0, %s318
      %s320 = sphi 0, %s318
      %s321 = sphi 0, %s320
      %s335 = sphi 0, %s321
      %s341 = sphi 0, %s343
      %s344 = sphi 0, %s341
      %s345 = sphi 0, %s344
      %s361 = sphi 0, %s345
    $region4: #{tpu_custom_call.1} parent=1 // loop_header_branch
      %30 = sbr.rel (%p28) target = $region8
    $region5: #{tpu_custom_call.1} parent=1 // loop_body
      %s32 = ssub.s32 %s27, 1
      %s33 = ssub.s32 %s27, 2
      %s34 = sadd.s32 %s27, 1
      %s35 = ssub.s32 %s27, %s34
      %p36 = scmp.eq.s32.totalorder %s35, 0
      %s38 = sadd.s32 %s37, 1
      %s39 = scalar_select %p36, %s37, %s38
      %p42 = pneg %p36
      %p43 = scmp.eq.s32.totalorder %s27, 1
      %p44 = por %p42, %p43
      %p45 = scmp.ne.s32.totalorder %s37, %s40
      %p46 = scmp.eq.s32.totalorder %s27, 0
      %p47 = por %p45, %p46
      %p48 = scmp.ne.s32.totalorder %s37, %s40
      %p49 = scmp.eq.s32.totalorder %s32, 1
      %p50 = por %p48, %p49
      %p51 = scmp.ne.s32.totalorder %s40, %s41
      %p52 = scmp.eq.s32.totalorder %s32, 0
      %p53 = por %p51, %p52
      %p54 = scmp.ne.s32.totalorder %s40, %s41
      %p55 = scmp.eq.s32.totalorder %s33, 1
      %p56 = por %p54, %p55
      %p58 = scmp.ne.s32.totalorder %s41, %s57
      %p59 = scmp.eq.s32.totalorder %s33, 0
      %p60 = por %p58, %p59
      %s61 = ssub.s32 %s27, %s34
      %p62 = scmp.eq.s32.totalorder %s61, 0
      %s64 = sadd.s32 %s63, 1
      %s65 = scalar_select %p62, %s63, %s64
      %p68 = pneg %p62
      %p69 = scmp.eq.s32.totalorder %s27, 1
      %p70 = por %p68, %p69
      %p71 = scmp.ne.s32.totalorder %s63, %s66
      %p72 = scmp.eq.s32.totalorder %s27, 0
      %p73 = por %p71, %p72
      %p74 = scmp.ne.s32.totalorder %s63, %s66
      %p75 = scmp.eq.s32.totalorder %s32, 1
      %p76 = por %p74, %p75
      %p77 = scmp.ne.s32.totalorder %s66, %s67
      %p78 = scmp.eq.s32.totalorder %s32, 0
      %p79 = por %p77, %p78
      %p80 = scmp.ne.s32.totalorder %s66, %s67
      %p81 = scmp.eq.s32.totalorder %s33, 1
      %p82 = por %p80, %p81
      %p84 = scmp.ne.s32.totalorder %s67, %s83
      %p85 = scmp.eq.s32.totalorder %s33, 0
      %p86 = por %p84, %p85
      %s88 = sadd.s32 %s87, 1
      %p91 = scmp.eq.s32.totalorder %s27, 1
      %p92 = scmp.ne.s32.totalorder %s87, %s89
      %p93 = scmp.eq.s32.totalorder %s27, 0
      %p94 = por %p92, %p93
      %p95 = scmp.ne.s32.totalorder %s87, %s89
      %p96 = scmp.eq.s32.totalorder %s32, 1
      %p97 = por %p95, %p96
      %p98 = scmp.ne.s32.totalorder %s89, %s90
      %p99 = scmp.eq.s32.totalorder %s32, 0
      %p100 = por %p98, %p99
      %p101 = scmp.ne.s32.totalorder %s89, %s90
      %p102 = scmp.eq.s32.totalorder %s33, 1
      %p103 = por %p101, %p102
      %p105 = scmp.ne.s32.totalorder %s90, %s104
      %p106 = scmp.eq.s32.totalorder %s33, 0
      %p107 = por %p105, %p106
      %s109 = sadd.s32 %s108, 1
      %p112 = scmp.eq.s32.totalorder %s27, 1
      %p113 = scmp.ne.s32.totalorder %s108, %s110
      %p114 = scmp.eq.s32.totalorder %s27, 0
      %p115 = por %p113, %p114
      %p116 = scmp.ne.s32.totalorder %s108, %s110
      %p117 = scmp.eq.s32.totalorder %s32, 1
      %p118 = por %p116, %p117
      %p119 = scmp.ne.s32.totalorder %s110, %s111
      %p120 = scmp.eq.s32.totalorder %s32, 0
      %p121 = por %p119, %p120
      %p122 = scmp.ne.s32.totalorder %s110, %s111
      %p123 = scmp.eq.s32.totalorder %s33, 1
      %p124 = por %p122, %p123
      %p126 = scmp.ne.s32.totalorder %s111, %s125
      %p127 = scmp.eq.s32.totalorder %s33, 0
      %p128 = por %p126, %p127
      %s130 = sadd.s32 %s129, 1
      %p133 = scmp.eq.s32.totalorder %s27, 1
      %p134 = scmp.ne.s32.totalorder %s129, %s131
      %p135 = scmp.eq.s32.totalorder %s27, 0
      %p136 = por %p134, %p135
      %p137 = scmp.ne.s32.totalorder %s129, %s131
      %p138 = scmp.eq.s32.totalorder %s32, 1
      %p139 = por %p137, %p138
      %p140 = scmp.ne.s32.totalorder %s131, %s132
      %p141 = scmp.eq.s32.totalorder %s32, 0
      %p142 = por %p140, %p141
      %p143 = scmp.ne.s32.totalorder %s131, %s132
      %p144 = scmp.eq.s32.totalorder %s33, 1
      %p145 = por %p143, %p144
      %p147 = scmp.ne.s32.totalorder %s132, %s146
      %p148 = scmp.eq.s32.totalorder %s33, 0
      %p149 = por %p147, %p148
      %s151 = sadd.s32 %s150, 1
      %p154 = scmp.eq.s32.totalorder %s27, 1
      %p155 = scmp.ne.s32.totalorder %s150, %s152
      %p156 = scmp.eq.s32.totalorder %s27, 0
      %p157 = por %p155, %p156
      %p158 = scmp.ne.s32.totalorder %s150, %s152
      %p159 = scmp.eq.s32.totalorder %s32, 1
      %p160 = por %p158, %p159
      %p161 = scmp.ne.s32.totalorder %s152, %s153
      %p162 = scmp.eq.s32.totalorder %s32, 0
      %p163 = por %p161, %p162
      %p164 = scmp.ne.s32.totalorder %s152, %s153
      %p165 = scmp.eq.s32.totalorder %s33, 1
      %p166 = por %p164, %p165
      %p168 = scmp.ne.s32.totalorder %s153, %s167
      %p169 = scmp.eq.s32.totalorder %s33, 0
      %p170 = por %p168, %p169
      %s172 = sadd.s32 %s171, 1
      %p175 = scmp.eq.s32.totalorder %s27, 1
      %p176 = scmp.ne.s32.totalorder %s171, %s173
      %p177 = scmp.eq.s32.totalorder %s27, 0
      %p178 = por %p176, %p177
      %p179 = scmp.ne.s32.totalorder %s171, %s173
      %p180 = scmp.eq.s32.totalorder %s32, 1
      %p181 = por %p179, %p180
      %p182 = scmp.ne.s32.totalorder %s173, %s174
      %p183 = scmp.eq.s32.totalorder %s32, 0
      %p184 = por %p182, %p183
      %p185 = scmp.ne.s32.totalorder %s173, %s174
      %p186 = scmp.eq.s32.totalorder %s33, 1
      %p187 = por %p185, %p186
      %p189 = scmp.ne.s32.totalorder %s174, %s188
      %p190 = scmp.eq.s32.totalorder %s33, 0
      %p191 = por %p189, %p190
      %s193 = sadd.s32 %s192, 1
      %p196 = scmp.eq.s32.totalorder %s27, 1
      %p197 = scmp.ne.s32.totalorder %s192, %s194
      %p198 = scmp.eq.s32.totalorder %s27, 0
      %p199 = por %p197, %p198
      %p200 = scmp.ne.s32.totalorder %s192, %s194
      %p201 = scmp.eq.s32.totalorder %s32, 1
      %p202 = por %p200, %p201
      %p203 = scmp.ne.s32.totalorder %s194, %s195
      %p204 = scmp.eq.s32.totalorder %s32, 0
      %p205 = por %p203, %p204
      %p206 = scmp.ne.s32.totalorder %s194, %s195
      %p207 = scmp.eq.s32.totalorder %s33, 1
      %p208 = por %p206, %p207
      %p210 = scmp.ne.s32.totalorder %s195, %s209
      %p211 = scmp.eq.s32.totalorder %s33, 0
      %p212 = por %p210, %p211
      %s214 = sadd.s32 %s213, 1
      %p217 = scmp.eq.s32.totalorder %s27, 1
      %p218 = scmp.ne.s32.totalorder %s213, %s215
      %p219 = scmp.eq.s32.totalorder %s27, 0
      %p220 = por %p218, %p219
      %p221 = scmp.ne.s32.totalorder %s213, %s215
      %p222 = scmp.eq.s32.totalorder %s32, 1
      %p223 = por %p221, %p222
      %p224 = scmp.ne.s32.totalorder %s215, %s216
      %p225 = scmp.eq.s32.totalorder %s32, 0
      %p226 = por %p224, %p225
      %p227 = scmp.ne.s32.totalorder %s215, %s216
      %p228 = scmp.eq.s32.totalorder %s33, 1
      %p229 = por %p227, %p228
      %p231 = scmp.ne.s32.totalorder %s216, %s230
      %p232 = scmp.eq.s32.totalorder %s33, 0
      %p233 = por %p231, %p232
      %s235 = sadd.s32 %s234, 1
      %p238 = scmp.eq.s32.totalorder %s27, 1
      %p239 = scmp.ne.s32.totalorder %s234, %s236
      %p240 = scmp.eq.s32.totalorder %s27, 0
      %p241 = por %p239, %p240
      %p242 = scmp.ne.s32.totalorder %s234, %s236
      %p243 = scmp.eq.s32.totalorder %s32, 1
      %p244 = por %p242, %p243
      %p245 = scmp.ne.s32.totalorder %s236, %s237
      %p246 = scmp.eq.s32.totalorder %s32, 0
      %p247 = por %p245, %p246
      %p248 = scmp.ne.s32.totalorder %s236, %s237
      %p249 = scmp.eq.s32.totalorder %s33, 1
      %p250 = por %p248, %p249
      %p252 = scmp.ne.s32.totalorder %s237, %s251
      %p253 = scmp.eq.s32.totalorder %s33, 0
      %p254 = por %p252, %p253
      %s256 = sadd.s32 %s255, 1
      %p259 = scmp.eq.s32.totalorder %s27, 1
      %p260 = scmp.ne.s32.totalorder %s255, %s257
      %p261 = scmp.eq.s32.totalorder %s27, 0
      %p262 = por %p260, %p261
      %p263 = scmp.ne.s32.totalorder %s255, %s257
      %p264 = scmp.eq.s32.totalorder %s32, 1
      %p265 = por %p263, %p264
      %p266 = scmp.ne.s32.totalorder %s257, %s258
      %p267 = scmp.eq.s32.totalorder %s32, 0
      %p268 = por %p266, %p267
      %p269 = scmp.ne.s32.totalorder %s257, %s258
      %p270 = scmp.eq.s32.totalorder %s33, 1
      %p271 = por %p269, %p270
      %p273 = scmp.ne.s32.totalorder %s258, %s272
      %p274 = scmp.eq.s32.totalorder %s33, 0
      %p275 = por %p273, %p274
      %s277 = sadd.s32 %s276, 1
      %p280 = scmp.eq.s32.totalorder %s27, 1
      %p281 = scmp.ne.s32.totalorder %s276, %s278
      %p282 = scmp.eq.s32.totalorder %s27, 0
      %p283 = por %p281, %p282
      %p284 = scmp.ne.s32.totalorder %s276, %s278
      %p285 = scmp.eq.s32.totalorder %s32, 1
      %p286 = por %p284, %p285
      %p287 = scmp.ne.s32.totalorder %s278, %s279
      %p288 = scmp.eq.s32.totalorder %s32, 0
      %p289 = por %p287, %p288
      %p290 = scmp.ne.s32.totalorder %s278, %s279
      %p291 = scmp.eq.s32.totalorder %s33, 1
      %p292 = por %p290, %p291
      %p294 = scmp.ne.s32.totalorder %s279, %s293
      %p295 = scmp.eq.s32.totalorder %s33, 0
      %p296 = por %p294, %p295
      %s298 = sadd.s32 %s297, 1
      %p301 = scmp.eq.s32.totalorder %s27, 1
      %p302 = scmp.ne.s32.totalorder %s297, %s299
      %p303 = scmp.eq.s32.totalorder %s27, 0
      %p304 = por %p302, %p303
      %p305 = scmp.ne.s32.totalorder %s297, %s299
      %p306 = scmp.eq.s32.totalorder %s32, 1
      %p307 = por %p305, %p306
      %p308 = scmp.ne.s32.totalorder %s299, %s300
      %p309 = scmp.eq.s32.totalorder %s32, 0
      %p310 = por %p308, %p309
      %p311 = scmp.ne.s32.totalorder %s299, %s300
      %p312 = scmp.eq.s32.totalorder %s33, 1
      %p313 = por %p311, %p312
      %p315 = scmp.ne.s32.totalorder %s300, %s314
      %p316 = scmp.eq.s32.totalorder %s33, 0
      %p317 = por %p315, %p316
      %s319 = sadd.s32 %s318, 1
      %p322 = scmp.eq.s32.totalorder %s27, 1
      %p323 = scmp.ne.s32.totalorder %s318, %s320
      %p324 = scmp.eq.s32.totalorder %s27, 0
      %p325 = por %p323, %p324
      %p326 = scmp.ne.s32.totalorder %s318, %s320
      %p327 = scmp.eq.s32.totalorder %s32, 1
      %p328 = por %p326, %p327
      %p329 = scmp.ne.s32.totalorder %s320, %s321
      %p330 = scmp.eq.s32.totalorder %s32, 0
      %p331 = por %p329, %p330
      %p332 = scmp.ne.s32.totalorder %s320, %s321
      %p333 = scmp.eq.s32.totalorder %s33, 1
      %p334 = por %p332, %p333
      %p336 = scmp.ne.s32.totalorder %s321, %s335
      %p337 = scmp.eq.s32.totalorder %s33, 0
      %p338 = por %p336, %p337
      %s339 = ssub.s32 %s27, %s34
      %p340 = scmp.eq.s32.totalorder %s339, 0
      %s342 = sadd.s32 %s341, 1
      %s343 = scalar_select %p340, %s341, %s342
      %p346 = pneg %p340
      %p347 = scmp.eq.s32.totalorder %s27, 1
      %p348 = por %p346, %p347
      %p349 = scmp.ne.s32.totalorder %s341, %s344
      %p350 = scmp.eq.s32.totalorder %s27, 0
      %p351 = por %p349, %p350
      %p352 = scmp.ne.s32.totalorder %s341, %s344
      %p353 = scmp.eq.s32.totalorder %s32, 1
      %p354 = por %p352, %p353
      %p355 = scmp.ne.s32.totalorder %s344, %s345
      %p356 = scmp.eq.s32.totalorder %s32, 0
      %p357 = por %p355, %p356
      %p358 = scmp.ne.s32.totalorder %s344, %s345
      %p359 = scmp.eq.s32.totalorder %s33, 1
      %p360 = por %p358, %p359
      %p362 = scmp.ne.s32.totalorder %s345, %s361
      %p363 = scmp.eq.s32.totalorder %s33, 0
      %p364 = por %p362, %p363
      %p365 = scmp.le.s32.totalorder 1, %s27
      %p366 = scmp.lt.s32.totalorder %s27, 3
      %p367 = pnand %p365, %p366
      %p368 = pneg %p367
      // Predicated region
      $region9: #{tpu_custom_call.1} parent=5 // pred_check
        _
      $region10: #{tpu_custom_call.1} parent=5 // pred_check_branch
        %370 = sbr.rel (%p367) target = $region12
      $region11: #{tpu_custom_call.1} parent=5 // pred_region
        %s371 = ssub.s32 %s27, 1
        // Predicated region
        $region13: #{tpu_custom_call.1} parent=11 // pred_check
          %p372 = pneg %p100
        $region14: #{tpu_custom_call.1} parent=11 // pred_check_branch
          %374 = sbr.rel (%p372) target = $region16
        $region15: #{tpu_custom_call.1} parent=11 // pred_region
          _
        $region16: #{tpu_custom_call.1} parent=11 // pred_fallthru
          _
        // Predicated region
        $region17: #{tpu_custom_call.1} parent=11 // pred_check
          %p375 = pneg %p121
        $region18: #{tpu_custom_call.1} parent=11 // pred_check_branch
          %377 = sbr.rel (%p375) target = $region20
        $region19: #{tpu_custom_call.1} parent=11 // pred_region
          _
        $region20: #{tpu_custom_call.1} parent=11 // pred_fallthru
          _
        // Predicated region
        $region21: #{tpu_custom_call.1} parent=11 // pred_check
          %p378 = pneg %p142
        $region22: #{tpu_custom_call.1} parent=11 // pred_check_branch
          %380 = sbr.rel (%p378) target = $region24
        $region23: #{tpu_custom_call.1} parent=11 // pred_region
          _
        $region24: #{tpu_custom_call.1} parent=11 // pred_fallthru
          _
        // Predicated region
        $region25: #{tpu_custom_call.1} parent=11 // pred_check
          %p381 = pneg %p163
        $region26: #{tpu_custom_call.1} parent=11 // pred_check_branch
          %383 = sbr.rel (%p381) target = $region28
        $region27: #{tpu_custom_call.1} parent=11 // pred_region
          _
        $region28: #{tpu_custom_call.1} parent=11 // pred_fallthru
          _
        // Predicated region
        $region29: #{tpu_custom_call.1} parent=11 // pred_check
          %p384 = pneg %p184
        $region30: #{tpu_custom_call.1} parent=11 // pred_check_branch
          %386 = sbr.rel (%p384) target = $region32
        $region31: #{tpu_custom_call.1} parent=11 // pred_region
          _
        $region32: #{tpu_custom_call.1} parent=11 // pred_fallthru
          _
        // Predicated region
        $region33: #{tpu_custom_call.1} parent=11 // pred_check
          %p387 = pneg %p205
        $region34: #{tpu_custom_call.1} parent=11 // pred_check_branch
          %389 = sbr.rel (%p387) target = $region36
        $region35: #{tpu_custom_call.1} parent=11 // pred_region
          _
        $region36: #{tpu_custom_call.1} parent=11 // pred_fallthru
          _
        // Predicated region
        $region37: #{tpu_custom_call.1} parent=11 // pred_check
          %p390 = pneg %p226
        $region38: #{tpu_custom_call.1} parent=11 // pred_check_branch
          %392 = sbr.rel (%p390) target = $region40
        $region39: #{tpu_custom_call.1} parent=11 // pred_region
          _
        $region40: #{tpu_custom_call.1} parent=11 // pred_fallthru
          _
        // Predicated region
        $region41: #{tpu_custom_call.1} parent=11 // pred_check
          %p393 = pneg %p247
        $region42: #{tpu_custom_call.1} parent=11 // pred_check_branch
          %395 = sbr.rel (%p393) target = $region44
        $region43: #{tpu_custom_call.1} parent=11 // pred_region
          _
        $region44: #{tpu_custom_call.1} parent=11 // pred_fallthru
          _
        // Predicated region
        $region45: #{tpu_custom_call.1} parent=11 // pred_check
          %p396 = pneg %p268
        $region46: #{tpu_custom_call.1} parent=11 // pred_check_branch
          %398 = sbr.rel (%p396) target = $region48
        $region47: #{tpu_custom_call.1} parent=11 // pred_region
          _
        $region48: #{tpu_custom_call.1} parent=11 // pred_fallthru
          _
        // Predicated region
        $region49: #{tpu_custom_call.1} parent=11 // pred_check
          %p399 = pneg %p289
        $region50: #{tpu_custom_call.1} parent=11 // pred_check_branch
          %401 = sbr.rel (%p399) target = $region52
        $region51: #{tpu_custom_call.1} parent=11 // pred_region
          _
        $region52: #{tpu_custom_call.1} parent=11 // pred_fallthru
          _
        // Predicated region
        $region53: #{tpu_custom_call.1} parent=11 // pred_check
          %p402 = pneg %p310
        $region54: #{tpu_custom_call.1} parent=11 // pred_check_branch
          %404 = sbr.rel (%p402) target = $region56
        $region55: #{tpu_custom_call.1} parent=11 // pred_region
          _
        $region56: #{tpu_custom_call.1} parent=11 // pred_fallthru
          _
        // Predicated region
        $region57: #{tpu_custom_call.1} parent=11 // pred_check
          %p405 = pneg %p331
        $region58: #{tpu_custom_call.1} parent=11 // pred_check_branch
          %407 = sbr.rel (%p405) target = $region60
        $region59: #{tpu_custom_call.1} parent=11 // pred_region
          _
        $region60: #{tpu_custom_call.1} parent=11 // pred_fallthru
          _
      $region12: #{tpu_custom_call.1} parent=5 // pred_fallthru
        _
      %p408 = scmp.lt.s32.totalorder %s27, 2
      // Predicated region
      $region61: #{tpu_custom_call.1} parent=5 // pred_check
        %p409 = pneg %p408
      $region62: #{tpu_custom_call.1} parent=5 // pred_check_branch
        %411 = sbr.rel (%p409) target = $region64
      $region63: #{tpu_custom_call.1} parent=5 // pred_region
        // Predicated region
        $region65: #{tpu_custom_call.1} parent=63 // pred_check
          %p412 = pneg %p47
        $region66: #{tpu_custom_call.1} parent=63 // pred_check_branch
          %414 = sbr.rel (%p412) target = $region68
        $region67: #{tpu_custom_call.1} parent=63 // pred_region
          %p415 = scmp.lt.s32.totalorder %s27, 1
          %s416 = scalar_select %p415, %s27, 1
          %s417 = smul.addr %s416, 8
          %s418 = scalar_lea.vmem %s0, %s417
        $region68: #{tpu_custom_call.1} parent=63 // pred_fallthru
          _
        // Predicated region
        $region69: #{tpu_custom_call.1} parent=63 // pred_check
          %p419 = pneg %p73
        $region70: #{tpu_custom_call.1} parent=63 // pred_check_branch
          %421 = sbr.rel (%p419) target = $region72
        $region71: #{tpu_custom_call.1} parent=63 // pred_region
          %p422 = scmp.lt.s32.totalorder %s27, 1
          %s423 = scalar_select %p422, %s27, 1
          %s424 = smul.addr %s423, 4
          %s425 = scalar_lea.vmem %s1, %s424
        $region72: #{tpu_custom_call.1} parent=63 // pred_fallthru
          _
      $region64: #{tpu_custom_call.1} parent=5 // pred_fallthru
        _
      %p426 = scmp.le.s32.totalorder 1, %s27
      %p427 = scmp.lt.s32.totalorder %s27, 3
      %p428 = pnand %p426, %p427
      %p429 = pneg %p428
      // Predicated region
      $region73: #{tpu_custom_call.1} parent=5 // pred_check
        _
      $region74: #{tpu_custom_call.1} parent=5 // pred_check_branch
        %431 = sbr.rel (%p428) target = $region76
      $region75: #{tpu_custom_call.1} parent=5 // pred_region
        %s432 = ssub.s32 %s27, 1
        %p433 = scmp.lt.s32.totalorder %s32, 1
        %s434 = scalar_select %p433, %s32, 1
        %s435 = smul.addr %s434, 8
        %s436 = scalar_lea.vmem %s0, %s435
        %p437 = pneg %p53
        %p438 = pneg %p50
        %p439 = scmp.lt.s32.totalorder %s32, 1
        %s440 = scalar_select %p439, %s32, 1
        %s441 = smul.addr %s440, 4
        %s442 = scalar_lea.vmem %s1, %s441
        %p443 = pneg %p79
        %p444 = pneg %p76
        %p445 = pneg %p100
        %p446 = pneg %p97
        %p447 = pneg %p121
        %p448 = pneg %p118
        %p449 = pneg %p142
        %p450 = pneg %p139
        %p451 = pneg %p163
        %p452 = pneg %p160
        %p453 = pneg %p184
        %p454 = pneg %p181
        %p455 = pneg %p205
        %p456 = pneg %p202
        %p457 = pneg %p226
        %p458 = pneg %p223
        %p459 = pneg %p247
        %p460 = pneg %p244
        %p461 = pneg %p268
        %p462 = pneg %p265
        %p463 = pneg %p289
        %p464 = pneg %p286
        %p465 = pneg %p310
        %p466 = pneg %p307
        %p467 = pneg %p331
        %p468 = pneg %p328
        %p469 = pneg %p357
        %p470 = pneg %p354
        %s471 = sand.u32 %s344, 1
        %s472 = scalar_lea.sflag [#allocation8], %s471
        %s473 = sand.u32 %s344, 1
        %s474 = smul.addr %s473, 2
        %s475 = scalar_lea.vmem [#allocation7], %s474
        %p476 = scmp.lt.s32.totalorder %s32, 1
        %s477 = scalar_select %p476, %s32, 1
        %s478 = smul.addr %s477, 8
        %s479 = scalar_lea.vmem %s0, %s478
        %p480 = scmp.lt.s32.totalorder %s32, 1
        %s481 = scalar_select %p480, %s32, 1
        %s482 = smul.addr %s481, 4
        %s483 = scalar_lea.vmem %s1, %s482
        %v484 = vld [vmem:[%s483] sm:$0x1]
        %v485 = vld [vmem:[%s483] sm:$0x3]
        %v486 = vld [vmem:[%s483 + $0x2] sm:$0x3]
        %v487 = vld [vmem:[%s479] sm:$0xff]
        %v489 = vlaneseq
        %v490 = vshrl.u32 %v489, 7
        %v491 = vsub.s32 0, %v490
        %v492 = vrot.slane %v484, %v491
        %v494 = vmul.f32 %v487, %v492
        %495 = vrot.lane.b32.xlu0 %v494, 1
        %v496 = vpop.permute.xlu0 %495
        %497 = vst [vmem:[#allocation2] sm:$0xff] %v496
        %498 = vst [vmem:[#allocation2 + $0x8] sm:$0xff] %v494
        %499 = vrot.lane.b32.xlu0 %v494, 127
        %v500 = vpop.permute.xlu0 %499
        %501 = vst [vmem:[#allocation2 + $0x10] sm:$0xff] %v500
        %v502 = vld [vmem:[%s2] sm:$0xff]
        %v503 = vld [vmem:[%s2 + $0x8] sm:$0xff]
        %v504 = vld [vmem:[%s2 + $0x10] sm:$0xff]
        %v505 = vld [vmem:[%s2 + $0x18] sm:$0xff]
        %v506 = vld [vmem:[#allocation2] sm:$0xff]
        %v507 = vld [vmem:[#allocation2 + $0x8] sm:$0xff]
        %v508 = vld [vmem:[#allocation2 + $0x10] sm:$0xff]
        %v509 = vld [vmem:[%s3] sm:$0xff]
        %v510 = vld [vmem:[%s3 + $0x8] sm:$0xff]
        %v511 = vld [vmem:[%s3 + $0x10] sm:$0xff]
        %v512 = vld [vmem:[%s3 + $0x18] sm:$0xff]
        %514 = vset.pattern.permute.xlu0 0
        %515 = vperm.xlu0 %514, %v509
        %v516 = vpop.permute.xlu0 %515
        %519 = vset.pattern.permute.xlu0 0
        %520 = vperm.xlu0 %519, %v510
        %v521 = vpop.permute.xlu0 %520
        %524 = vset.pattern.permute.xlu0 0
        %525 = vperm.xlu0 %524, %v511
        %v526 = vpop.permute.xlu0 %525
        %529 = vset.pattern.permute.xlu0 0
        %530 = vperm.xlu0 %529, %v512
        %v531 = vpop.permute.xlu0 %530
        %vm533 = vcmask 195584
        %v535 = vsel %vm533, %v502, 0
        %v538 = vsel %vm533, %v503, 0
        %v541 = vsel %vm533, %v504, 0
        %v544 = vsel %vm533, %v505, 0
        %546 = vmatprep.subr.mxu0 0.0
        %547 = vmatpush1.msra.mxu0 %v506
        %548 = vmatprep.subr.mxu0 0.0
        %549 = vmatpush1.msra.mxu0 %v507
        %550 = vmatprep.subr.mxu0 0.0
        %551 = vmatpush1.msra.mxu0 %v508
        %552 = vmatprep.subr.mxu0 0.0
        %553 = vmatpush1.msra.mxu0 0.0
        %554 = vmatprep.subr.mxu0 0.0
        %555 = vmatpush1.msra.mxu0 0.0
        %556 = vmatprep.subr.mxu0 0.0
        %557 = vmatpush1.msra.mxu0 0.0
        %558 = vmatprep.subr.mxu0 0.0
        %559 = vmatpush1.msra.mxu0 0.0
        %560 = vmatprep.subr.mxu0 0.0
        %561 = vmatpush1.msra.mxu0 0.0
        %562 = vmatprep.subr.mxu0 0.0
        %563 = vmatpush1.msra.mxu0 0.0
        %564 = vmatprep.subr.mxu0 0.0
        %565 = vmatpush1.msra.mxu0 0.0
        %566 = vmatprep.subr.mxu0 0.0
        %567 = vmatpush1.msra.mxu0 0.0
        %568 = vmatprep.subr.mxu0 0.0
        %569 = vmatpush1.msra.mxu0 0.0
        %570 = vmatprep.subr.mxu0 0.0
        %571 = vmatpush1.msra.mxu0 0.0
        %572 = vmatprep.subr.mxu0 0.0
        %573 = vmatpush1.msra.mxu0 0.0
        %574 = vmatprep.subr.mxu0 0.0
        %575 = vmatpush1.msra.mxu0 0.0
        %576 = vmatprep.subr.mxu0 0.0
        %577 = vmatpush1.msra.mxu0 0.0
        %578 = vmatprep.subr.mxu0 0.0
        %579 = vmatpush1.msra.mxu0 0.0
        %580 = vmatprep.subr.mxu0 0.0
        %581 = vmatpush1.msra.mxu0 0.0
        %582 = vmatprep.subr.mxu0 0.0
        %583 = vmatpush1.msra.mxu0 0.0
        %584 = vmatprep.subr.mxu0 0.0
        %585 = vmatpush1.msra.mxu0 0.0
        %586 = vmatprep.subr.mxu0 0.0
        %587 = vmatpush1.msra.mxu0 0.0
        %588 = vmatprep.subr.mxu0 0.0
        %589 = vmatpush1.msra.mxu0 0.0
        %590 = vmatprep.subr.mxu0 0.0
        %591 = vmatpush1.msra.mxu0 0.0
        %592 = vmatprep.subr.mxu0 0.0
        %593 = vmatpush1.msra.mxu0 0.0
        %594 = vmatprep.subr.mxu0 0.0
        %595 = vmatpush1.msra.mxu0 0.0
        %596 = vmatprep.subr.mxu0 0.0
        %597 = vmatpush1.msra.mxu0 0.0
        %598 = vmatprep.subr.mxu0 0.0
        %599 = vmatpush1.msra.mxu0 0.0
        %600 = vmatprep.subr.mxu0 0.0
        %601 = vmatpush1.msra.mxu0 0.0
        %602 = vmatprep.subr.mxu0 0.0
        %603 = vmatpush1.msra.mxu0 0.0
        %604 = vmatprep.subr.mxu0 0.0
        %605 = vmatpush1.msra.mxu0 0.0
        %606 = vmatprep.subr.mxu0 0.0
        %607 = vmatpush1.msra.mxu0 0.0
        %608 = vmatprep.subr.mxu0 0.0
        %609 = vmatpush1.msra.mxu0 0.0
        %610 = vmatprep.mubr.f32.mxu0 0.0
        %611 = vmatmul.mubr.f32.gmra.mrb[0].mxu0 %v535
        %v612 = vpop.f32.mrb[0].mxu0
        %v613 = vadd.f32 %v516, %v612
        %v614 = vpop.f32.mrb[0].mxu0
        %615 = vmatprep.mubr.f32.mxu0 0.0
        %616 = vmatmul.mubr.f32.gmra.mrb[0].mxu0 %v538
        %v617 = vpop.f32.mrb[0].mxu0
        %v618 = vadd.f32 %v521, %v617
        %v619 = vpop.f32.mrb[0].mxu0
        %620 = vmatprep.mubr.f32.mxu0 0.0
        %621 = vmatmul.mubr.f32.gmra.mrb[0].mxu0 %v541
        %v622 = vpop.f32.mrb[0].mxu0
        %v623 = vadd.f32 %v526, %v622
        %v624 = vpop.f32.mrb[0].mxu0
        %625 = vmatprep.mubr.f32.mxu0 0.0
        %626 = vmatmul.mubr.f32.gmra.mrb[0].mxu0 %v544
        %v627 = vpop.f32.mrb[0].mxu0
        %v628 = vadd.f32 %v531, %v627
        %v629 = vpop.f32.mrb[0].mxu0
        %630 = vdwg.mxu0
        %v631 = vmul.f32 %v613, %v492
        %v632 = vmul.f32 %v618, %v492
        %v633 = vmul.f32 %v623, %v492
        %v634 = vmul.f32 %v628, %v492
        %635 = vrot.lane.b32.xlu0 %v631, 1
        %v636 = vpop.permute.xlu0 %635
        %637 = vrot.lane.b32.xlu0 %v632, 1
        %v638 = vpop.permute.xlu0 %637
        %639 = vrot.lane.b32.xlu0 %v633, 1
        %v640 = vpop.permute.xlu0 %639
        %641 = vrot.lane.b32.xlu0 %v634, 1
        %v642 = vpop.permute.xlu0 %641
        %643 = vst [vmem:[#allocation2] sm:$0xff] %v636
        %644 = vst [vmem:[#allocation2 + $0x8] sm:$0xff] %v638
        %645 = vst [vmem:[#allocation2 + $0x10] sm:$0xff] %v640
        %646 = vst [vmem:[#allocation2 + $0x18] sm:$0xff] %v642
        %647 = vst [vmem:[#allocation2 + $0x20] sm:$0xff] %v631
        %648 = vst [vmem:[#allocation2 + $0x28] sm:$0xff] %v632
        %649 = vst [vmem:[#allocation2 + $0x30] sm:$0xff] %v633
        %650 = vst [vmem:[#allocation2 + $0x38] sm:$0xff] %v634
        %651 = vrot.lane.b32.xlu0 %v631, 127
        %v652 = vpop.permute.xlu0 %651
        %653 = vrot.lane.b32.xlu0 %v632, 127
        %v654 = vpop.permute.xlu0 %653
        %655 = vrot.lane.b32.xlu0 %v633, 127
        %v656 = vpop.permute.xlu0 %655
        %657 = vrot.lane.b32.xlu0 %v634, 127
        %v658 = vpop.permute.xlu0 %657
        %659 = vst [vmem:[#allocation2 + $0x40] sm:$0xff] %v652
        %660 = vst [vmem:[#allocation2 + $0x48] sm:$0xff] %v654
        %661 = vst [vmem:[#allocation2 + $0x50] sm:$0xff] %v656
        %662 = vst [vmem:[#allocation2 + $0x58] sm:$0xff] %v658
        %v663 = vld [vmem:[%s4] sm:$0xff]
        %v664 = vld [vmem:[%s4 + $0x8] sm:$0xff]
        %v665 = vld [vmem:[%s4 + $0x10] sm:$0xff]
        %v666 = vld [vmem:[%s4 + $0x18] sm:$0xff]
        %v667 = vld [vmem:[#allocation2] sm:$0xff]
        %v668 = vld [vmem:[#allocation2 + $0x8] sm:$0xff]
        %v669 = vld [vmem:[#allocation2 + $0x10] sm:$0xff]
        %v670 = vld [vmem:[#allocation2 + $0x18] sm:$0xff]
        %v671 = vld [vmem:[#allocation2 + $0x20] sm:$0xff]
        %v672 = vld [vmem:[#allocation2 + $0x28] sm:$0xff]
        %v673 = vld [vmem:[#allocation2 + $0x30] sm:$0xff]
        %v674 = vld [vmem:[#allocation2 + $0x38] sm:$0xff]
        %v675 = vld [vmem:[#allocation2 + $0x40] sm:$0xff]
        %v676 = vld [vmem:[#allocation2 + $0x48] sm:$0xff]
        %v677 = vld [vmem:[#allocation2 + $0x50] sm:$0xff]
        %v678 = vld [vmem:[#allocation2 + $0x58] sm:$0xff]
        %v679 = vld [vmem:[%s5] sm:$0xff]
        %v680 = vld [vmem:[%s5 + $0x8] sm:$0xff]
        %v681 = vld [vmem:[%s5 + $0x10] sm:$0xff]
        %v682 = vld [vmem:[%s5 + $0x18] sm:$0xff]
        %684 = vset.pattern.permute.xlu0 0
        %685 = vperm.xlu0 %684, %v679
        %v686 = vpop.permute.xlu0 %685
        %689 = vset.pattern.permute.xlu0 0
        %690 = vperm.xlu0 %689, %v680
        %v691 = vpop.permute.xlu0 %690
        %694 = vset.pattern.permute.xlu0 0
        %695 = vperm.xlu0 %694, %v681
        %v696 = vpop.permute.xlu0 %695
        %699 = vset.pattern.permute.xlu0 0
        %700 = vperm.xlu0 %699, %v682
        %v701 = vpop.permute.xlu0 %700
        %vm703 = vcmask 785408
        %v705 = vsel %vm703, %v663, 0
        %v708 = vsel %vm703, %v664, 0
        %v711 = vsel %vm703, %v665, 0
        %v714 = vsel %vm703, %v666, 0
        %716 = vmatprep.subr.mxu0 0.0
        %717 = vmatpush1.msra.mxu0 %v667
        %718 = vmatprep.subr.mxu0 0.0
        %719 = vmatpush1.msra.mxu0 %v668
        %720 = vmatprep.subr.mxu0 0.0
        %721 = vmatpush1.msra.mxu0 %v669
        %722 = vmatprep.subr.mxu0 0.0
        %723 = vmatpush1.msra.mxu0 %v670
        %724 = vmatprep.subr.mxu0 0.0
        %725 = vmatpush1.msra.mxu0 %v671
        %726 = vmatprep.subr.mxu0 0.0
        %727 = vmatpush1.msra.mxu0 %v672
        %728 = vmatprep.subr.mxu0 0.0
        %729 = vmatpush1.msra.mxu0 %v673
        %730 = vmatprep.subr.mxu0 0.0
        %731 = vmatpush1.msra.mxu0 %v674
        %732 = vmatprep.subr.mxu0 0.0
        %733 = vmatpush1.msra.mxu0 %v675
        %734 = vmatprep.subr.mxu0 0.0
        %735 = vmatpush1.msra.mxu0 %v676
        %736 = vmatprep.subr.mxu0 0.0
        %737 = vmatpush1.msra.mxu0 %v677
        %738 = vmatprep.subr.mxu0 0.0
        %739 = vmatpush1.msra.mxu0 %v678
        %740 = vmatprep.subr.mxu0 0.0
        %741 = vmatpush1.msra.mxu0 0.0
        %742 = vmatprep.subr.mxu0 0.0
        %743 = vmatpush1.msra.mxu0 0.0
        %744 = vmatprep.subr.mxu0 0.0
        %745 = vmatpush1.msra.mxu0 0.0
        %746 = vmatprep.subr.mxu0 0.0
        %747 = vmatpush1.msra.mxu0 0.0
        %748 = vmatprep.subr.mxu0 0.0
        %749 = vmatpush1.msra.mxu0 0.0
        %750 = vmatprep.subr.mxu0 0.0
        %751 = vmatpush1.msra.mxu0 0.0
        %752 = vmatprep.subr.mxu0 0.0
        %753 = vmatpush1.msra.mxu0 0.0
        %754 = vmatprep.subr.mxu0 0.0
        %755 = vmatpush1.msra.mxu0 0.0
        %756 = vmatprep.subr.mxu0 0.0
        %757 = vmatpush1.msra.mxu0 0.0
        %758 = vmatprep.subr.mxu0 0.0
        %759 = vmatpush1.msra.mxu0 0.0
        %760 = vmatprep.subr.mxu0 0.0
        %761 = vmatpush1.msra.mxu0 0.0
        %762 = vmatprep.subr.mxu0 0.0
        %763 = vmatpush1.msra.mxu0 0.0
        %764 = vmatprep.subr.mxu0 0.0
        %765 = vmatpush1.msra.mxu0 0.0
        %766 = vmatprep.subr.mxu0 0.0
        %767 = vmatpush1.msra.mxu0 0.0
        %768 = vmatprep.subr.mxu0 0.0
        %769 = vmatpush1.msra.mxu0 0.0
        %770 = vmatprep.subr.mxu0 0.0
        %771 = vmatpush1.msra.mxu0 0.0
        %772 = vmatprep.subr.mxu0 0.0
        %773 = vmatpush1.msra.mxu0 0.0
        %774 = vmatprep.subr.mxu0 0.0
        %775 = vmatpush1.msra.mxu0 0.0
        %776 = vmatprep.subr.mxu0 0.0
        %777 = vmatpush1.msra.mxu0 0.0
        %778 = vmatprep.subr.mxu0 0.0
        %779 = vmatpush1.msra.mxu0 0.0
        %780 = vmatprep.mubr.f32.mxu0 0.0
        %781 = vmatmul.mubr.f32.gmra.mrb[0].mxu0 %v705
        %v782 = vpop.f32.mrb[0].mxu0
        %v783 = vadd.f32 %v686, %v782
        %v784 = vpop.f32.mrb[0].mxu0
        %785 = vmatprep.mubr.f32.mxu0 0.0
        %786 = vmatmul.mubr.f32.gmra.mrb[0].mxu0 %v708
        %v787 = vpop.f32.mrb[0].mxu0
        %v788 = vadd.f32 %v691, %v787
        %v789 = vpop.f32.mrb[0].mxu0
        %790 = vmatprep.mubr.f32.mxu0 0.0
        %791 = vmatmul.mubr.f32.gmra.mrb[0].mxu0 %v711
        %v792 = vpop.f32.mrb[0].mxu0
        %v793 = vadd.f32 %v696, %v792
        %v794 = vpop.f32.mrb[0].mxu0
        %795 = vmatprep.mubr.f32.mxu0 0.0
        %796 = vmatmul.mubr.f32.gmra.mrb[0].mxu0 %v714
        %v797 = vpop.f32.mrb[0].mxu0
        %v798 = vadd.f32 %v701, %v797
        %v799 = vpop.f32.mrb[0].mxu0
        %800 = vdwg.mxu0
        %v801 = vmul.f32 %v783, %v492
        %v802 = vmul.f32 %v788, %v492
        %v803 = vmul.f32 %v793, %v492
        %v804 = vmul.f32 %v798, %v492
        %805 = vrot.lane.b32.xlu0 %v801, 1
        %v806 = vpop.permute.xlu0 %805
        %807 = vrot.lane.b32.xlu0 %v802, 1
        %v808 = vpop.permute.xlu0 %807
        %809 = vrot.lane.b32.xlu0 %v803, 1
        %v810 = vpop.permute.xlu0 %809
        %811 = vrot.lane.b32.xlu0 %v804, 1
        %v812 = vpop.permute.xlu0 %811
        %813 = vst [vmem:[#allocation2] sm:$0xff] %v806
        %814 = vst [vmem:[#allocation2 + $0x8] sm:$0xff] %v808
        %815 = vst [vmem:[#allocation2 + $0x10] sm:$0xff] %v810
        %816 = vst [vmem:[#allocation2 + $0x18] sm:$0xff] %v812
        %817 = vst [vmem:[#allocation2 + $0x20] sm:$0xff] %v801
        %818 = vst [vmem:[#allocation2 + $0x28] sm:$0xff] %v802
        %819 = vst [vmem:[#allocation2 + $0x30] sm:$0xff] %v803
        %820 = vst [vmem:[#allocation2 + $0x38] sm:$0xff] %v804
        %821 = vrot.lane.b32.xlu0 %v801, 127
        %v822 = vpop.permute.xlu0 %821
        %823 = vrot.lane.b32.xlu0 %v802, 127
        %v824 = vpop.permute.xlu0 %823
        %825 = vrot.lane.b32.xlu0 %v803, 127
        %v826 = vpop.permute.xlu0 %825
        %827 = vrot.lane.b32.xlu0 %v804, 127
        %v828 = vpop.permute.xlu0 %827
        %829 = vst [vmem:[#allocation2 + $0x40] sm:$0xff] %v822
        %830 = vst [vmem:[#allocation2 + $0x48] sm:$0xff] %v824
        %831 = vst [vmem:[#allocation2 + $0x50] sm:$0xff] %v826
        %832 = vst [vmem:[#allocation2 + $0x58] sm:$0xff] %v828
        %v833 = vld [vmem:[%s8] sm:$0xff]
        %v834 = vld [vmem:[%s8 + $0x8] sm:$0xff]
        %v835 = vld [vmem:[%s8 + $0x10] sm:$0xff]
        %v836 = vld [vmem:[%s8 + $0x18] sm:$0xff]
        %v837 = vld [vmem:[#allocation2] sm:$0xff]
        %v838 = vld [vmem:[#allocation2 + $0x8] sm:$0xff]
        %v839 = vld [vmem:[#allocation2 + $0x10] sm:$0xff]
        %v840 = vld [vmem:[#allocation2 + $0x18] sm:$0xff]
        %v841 = vld [vmem:[#allocation2 + $0x20] sm:$0xff]
        %v842 = vld [vmem:[#allocation2 + $0x28] sm:$0xff]
        %v843 = vld [vmem:[#allocation2 + $0x30] sm:$0xff]
        %v844 = vld [vmem:[#allocation2 + $0x38] sm:$0xff]
        %v845 = vld [vmem:[#allocation2 + $0x40] sm:$0xff]
        %v846 = vld [vmem:[#allocation2 + $0x48] sm:$0xff]
        %v847 = vld [vmem:[#allocation2 + $0x50] sm:$0xff]
        %v848 = vld [vmem:[#allocation2 + $0x58] sm:$0xff]
        %v850 = vsel %vm703, %v833, 0
        %v853 = vsel %vm703, %v834, 0
        %v856 = vsel %vm703, %v835, 0
        %v859 = vsel %vm703, %v836, 0
        %861 = vmatprep.subr.mxu0 0.0
        %862 = vmatpush1.msra.mxu0 %v837
        %863 = vmatprep.subr.mxu0 0.0
        %864 = vmatpush1.msra.mxu0 %v838
        %865 = vmatprep.subr.mxu0 0.0
        %866 = vmatpush1.msra.mxu0 %v839
        %867 = vmatprep.subr.mxu0 0.0
        %868 = vmatpush1.msra.mxu0 %v840
        %869 = vmatprep.subr.mxu0 0.0
        %870 = vmatpush1.msra.mxu0 %v841
        %871 = vmatprep.subr.mxu0 0.0
        %872 = vmatpush1.msra.mxu0 %v842
        %873 = vmatprep.subr.mxu0 0.0
        %874 = vmatpush1.msra.mxu0 %v843
        %875 = vmatprep.subr.mxu0 0.0
        %876 = vmatpush1.msra.mxu0 %v844
        %877 = vmatprep.subr.mxu0 0.0
        %878 = vmatpush1.msra.mxu0 %v845
        %879 = vmatprep.subr.mxu0 0.0
        %880 = vmatpush1.msra.mxu0 %v846
        %881 = vmatprep.subr.mxu0 0.0
        %882 = vmatpush1.msra.mxu0 %v847
        %883 = vmatprep.subr.mxu0 0.0
        %884 = vmatpush1.msra.mxu0 %v848
        %885 = vmatprep.subr.mxu0 0.0
        %886 = vmatpush1.msra.mxu0 0.0
        %887 = vmatprep.subr.mxu0 0.0
        %888 = vmatpush1.msra.mxu0 0.0
        %889 = vmatprep.subr.mxu0 0.0
        %890 = vmatpush1.msra.mxu0 0.0
        %891 = vmatprep.subr.mxu0 0.0
        %892 = vmatpush1.msra.mxu0 0.0
        %893 = vmatprep.subr.mxu0 0.0
        %894 = vmatpush1.msra.mxu0 0.0
        %895 = vmatprep.subr.mxu0 0.0
        %896 = vmatpush1.msra.mxu0 0.0
        %897 = vmatprep.subr.mxu0 0.0
        %898 = vmatpush1.msra.mxu0 0.0
        %899 = vmatprep.subr.mxu0 0.0
        %900 = vmatpush1.msra.mxu0 0.0
        %901 = vmatprep.subr.mxu0 0.0
        %902 = vmatpush1.msra.mxu0 0.0
        %903 = vmatprep.subr.mxu0 0.0
        %904 = vmatpush1.msra.mxu0 0.0
        %905 = vmatprep.subr.mxu0 0.0
        %906 = vmatpush1.msra.mxu0 0.0
        %907 = vmatprep.subr.mxu0 0.0
        %908 = vmatpush1.msra.mxu0 0.0
        %909 = vmatprep.subr.mxu0 0.0
        %910 = vmatpush1.msra.mxu0 0.0
        %911 = vmatprep.subr.mxu0 0.0
        %912 = vmatpush1.msra.mxu0 0.0
        %913 = vmatprep.subr.mxu0 0.0
        %914 = vmatpush1.msra.mxu0 0.0
        %915 = vmatprep.subr.mxu0 0.0
        %916 = vmatpush1.msra.mxu0 0.0
        %917 = vmatprep.subr.mxu0 0.0
        %918 = vmatpush1.msra.mxu0 0.0
        %919 = vmatprep.subr.mxu0 0.0
        %920 = vmatpush1.msra.mxu0 0.0
        %921 = vmatprep.subr.mxu0 0.0
        %922 = vmatpush1.msra.mxu0 0.0
        %923 = vmatprep.subr.mxu0 0.0
        %924 = vmatpush1.msra.mxu0 0.0
        %925 = vmatprep.mubr.f32.mxu0 0.0
        %926 = vmatmul.mubr.f32.gmra.mrb[0].mxu0 %v850
        %v927 = vpop.f32.mrb[0].mxu0
        %v928 = vadd.f32 0.0, %v927
        %v929 = vpop.f32.mrb[0].mxu0
        %930 = vmatprep.mubr.f32.mxu0 0.0
        %931 = vmatmul.mubr.f32.gmra.mrb[0].mxu0 %v853
        %v932 = vpop.f32.mrb[0].mxu0
        %v933 = vadd.f32 0.0, %v932
        %v934 = vpop.f32.mrb[0].mxu0
        %935 = vmatprep.mubr.f32.mxu0 0.0
        %936 = vmatmul.mubr.f32.gmra.mrb[0].mxu0 %v856
        %v937 = vpop.f32.mrb[0].mxu0
        %v938 = vadd.f32 0.0, %v937
        %v939 = vpop.f32.mrb[0].mxu0
        %940 = vmatprep.mubr.f32.mxu0 0.0
        %941 = vmatmul.mubr.f32.gmra.mrb[0].mxu0 %v859
        %v942 = vpop.f32.mrb[0].mxu0
        %v943 = vadd.f32 0.0, %v942
        %v944 = vpop.f32.mrb[0].mxu0
        %945 = vdwg.mxu0
        %946 = vst [vmem:[#allocation4] sm:$0xff] %v928
        %947 = vst [vmem:[#allocation4 + $0x10] sm:$0xff] %v933
        %948 = vst [vmem:[#allocation4 + $0x20] sm:$0xff] %v938
        %949 = vst [vmem:[#allocation4 + $0x30] sm:$0xff] %v943
        %950 = vst [vmem:[#allocation4 + $0x8] sm:$0xff] %v928
        %951 = vst [vmem:[#allocation4 + $0x18] sm:$0xff] %v933
        %952 = vst [vmem:[#allocation4 + $0x28] sm:$0xff] %v938
        %953 = vst [vmem:[#allocation4 + $0x38] sm:$0xff] %v943
        %v954 = vld [vmem:[%s6] sm:$0xff]
        %v955 = vld [vmem:[%s6 + $0x8] sm:$0xff]
        %v956 = vld [vmem:[%s6 + $0x10] sm:$0xff]
        %v957 = vld [vmem:[%s6 + $0x18] sm:$0xff]
        %959 = vset.pattern.permute.xlu0 0
        %960 = vperm.xlu0 %959, %v954
        %v961 = vpop.permute.xlu0 %960
        %964 = vset.pattern.permute.xlu0 0
        %965 = vperm.xlu0 %964, %v955
        %v966 = vpop.permute.xlu0 %965
        %969 = vset.pattern.permute.xlu0 0
        %970 = vperm.xlu0 %969, %v956
        %v971 = vpop.permute.xlu0 %970
        %974 = vset.pattern.permute.xlu0 0
        %975 = vperm.xlu0 %974, %v957
        %v976 = vpop.permute.xlu0 %975
        %v979 = vlaneseq
        %v980 = vshrl.u32 %v979, 7
        %v981 = vsub.s32 0, %v980
        %v982 = vrot.slane %v486, %v981
        %v983 = vlaneseq
        %v984 = vshrl.u32 %v983, 7
        %v985 = vsub.s32 1, %v984
        %v986 = vrot.slane %v486, %v985
        %v989 = vmul.f32 %v961, %v982
        %v990 = vmul.f32 %v961, %v986
        %v991 = vmul.f32 %v966, %v982
        %v992 = vmul.f32 %v966, %v986
        %v993 = vmul.f32 %v971, %v982
        %v994 = vmul.f32 %v971, %v986
        %v995 = vmul.f32 %v976, %v982
        %v996 = vmul.f32 %v976, %v986
        %v997 = vld [vmem:[%s7] sm:$0xff]
        %v998 = vld [vmem:[%s7 + $0x8] sm:$0xff]
        %v999 = vld [vmem:[%s7 + $0x10] sm:$0xff]
        %v1000 = vld [vmem:[%s7 + $0x18] sm:$0xff]
        %1002 = vset.pattern.permute.xlu0 0
        %1003 = vperm.xlu0 %1002, %v997
        %v1004 = vpop.permute.xlu0 %1003
        %1007 = vset.pattern.permute.xlu0 0
        %1008 = vperm.xlu0 %1007, %v998
        %v1009 = vpop.permute.xlu0 %1008
        %1012 = vset.pattern.permute.xlu0 0
        %1013 = vperm.xlu0 %1012, %v999
        %v1014 = vpop.permute.xlu0 %1013
        %1017 = vset.pattern.permute.xlu0 0
        %1018 = vperm.xlu0 %1017, %v1000
        %v1019 = vpop.permute.xlu0 %1018
        %v1021 = vadd.f32 %v989, %v1004
        %v1022 = vadd.f32 %v990, %v1004
        %v1023 = vadd.f32 %v991, %v1009
        %v1024 = vadd.f32 %v992, %v1009
        %v1025 = vadd.f32 %v993, %v1014
        %v1026 = vadd.f32 %v994, %v1014
        %v1027 = vadd.f32 %v995, %v1019
        %v1028 = vadd.f32 %v996, %v1019
        %v1030 = vlaneseq
        %v1031 = vshrl.u32 %v1030, 7
        %v1032 = vsub.s32 0, %v1031
        %v1033 = vrot.slane %v485, %v1032
        %v1034 = vlaneseq
        %v1035 = vshrl.u32 %v1034, 7
        %v1036 = vsub.s32 1, %v1035
        %v1037 = vrot.slane %v485, %v1036
        %v1040 = vmul.f32 %v1021, %v1033
        %v1041 = vmul.f32 %v1022, %v1037
        %v1042 = vmul.f32 %v1023, %v1033
        %v1043 = vmul.f32 %v1024, %v1037
        %v1044 = vmul.f32 %v1025, %v1033
        %v1045 = vmul.f32 %v1026, %v1037
        %v1046 = vmul.f32 %v1027, %v1033
        %v1047 = vmul.f32 %v1028, %v1037
        %1048 = vrot.lane.b32.xlu0 %v1040, 1
        %v1049 = vpop.permute.xlu0 %1048
        %1050 = vrot.lane.b32.xlu0 %v1042, 1
        %v1051 = vpop.permute.xlu0 %1050
        %1052 = vrot.lane.b32.xlu0 %v1044, 1
        %v1053 = vpop.permute.xlu0 %1052
        %1054 = vrot.lane.b32.xlu0 %v1046, 1
        %v1055 = vpop.permute.xlu0 %1054
        %1056 = vrot.lane.b32.xlu0 %v1041, 1
        %v1057 = vpop.permute.xlu0 %1056
        %1058 = vrot.lane.b32.xlu0 %v1043, 1
        %v1059 = vpop.permute.xlu0 %1058
        %1060 = vrot.lane.b32.xlu0 %v1045, 1
        %v1061 = vpop.permute.xlu0 %1060
        %1062 = vrot.lane.b32.xlu0 %v1047, 1
        %v1063 = vpop.permute.xlu0 %1062
        %v1064 = vlaneseq
        %v1065 = vand.u32 %v1064, 127
        %vm1066 = vcmp.lt.s32.totalorder %v1065, 1
        %v1067 = vsel %vm1066, %v1049, %v1057
        %v1068 = vsel %vm1066, %v1051, %v1059
        %v1069 = vsel %vm1066, %v1053, %v1061
        %v1070 = vsel %vm1066, %v1055, %v1063
        %v1071 = vsel %vm1066, %v1057, %v1049
        %v1072 = vsel %vm1066, %v1059, %v1051
        %v1073 = vsel %vm1066, %v1061, %v1053
        %v1074 = vsel %vm1066, %v1063, %v1055
        %1075 = vst [vmem:[#allocation3] sm:$0xff] %v1071
        %1076 = vst [vmem:[#allocation3 + $0x8] sm:$0xff] %v1067
        %1077 = vst [vmem:[#allocation3 + $0x10] sm:$0xff] %v1072
        %1078 = vst [vmem:[#allocation3 + $0x18] sm:$0xff] %v1068
        %1079 = vst [vmem:[#allocation3 + $0x20] sm:$0xff] %v1073
        %1080 = vst [vmem:[#allocation3 + $0x28] sm:$0xff] %v1069
        %1081 = vst [vmem:[#allocation3 + $0x30] sm:$0xff] %v1074
        %1082 = vst [vmem:[#allocation3 + $0x38] sm:$0xff] %v1070
        %1083 = vst [vmem:[#allocation3 + $0x40] sm:$0xff] %v1040
        %1084 = vst [vmem:[#allocation3 + $0x48] sm:$0xff] %v1041
        %1085 = vst [vmem:[#allocation3 + $0x50] sm:$0xff] %v1042
        %1086 = vst [vmem:[#allocation3 + $0x58] sm:$0xff] %v1043
        %1087 = vst [vmem:[#allocation3 + $0x60] sm:$0xff] %v1044
        %1088 = vst [vmem:[#allocation3 + $0x68] sm:$0xff] %v1045
        %1089 = vst [vmem:[#allocation3 + $0x70] sm:$0xff] %v1046
        %1090 = vst [vmem:[#allocation3 + $0x78] sm:$0xff] %v1047
        %1091 = vrot.lane.b32.xlu0 %v1040, 127
        %v1092 = vpop.permute.xlu0 %1091
        %1093 = vrot.lane.b32.xlu0 %v1042, 127
        %v1094 = vpop.permute.xlu0 %1093
        %1095 = vrot.lane.b32.xlu0 %v1044, 127
        %v1096 = vpop.permute.xlu0 %1095
        %1097 = vrot.lane.b32.xlu0 %v1046, 127
        %v1098 = vpop.permute.xlu0 %1097
        %1099 = vrot.lane.b32.xlu0 %v1041, 127
        %v1100 = vpop.permute.xlu0 %1099
        %1101 = vrot.lane.b32.xlu0 %v1043, 127
        %v1102 = vpop.permute.xlu0 %1101
        %1103 = vrot.lane.b32.xlu0 %v1045, 127
        %v1104 = vpop.permute.xlu0 %1103
        %1105 = vrot.lane.b32.xlu0 %v1047, 127
        %v1106 = vpop.permute.xlu0 %1105
        %vm1107 = vcmp.lt.s32.totalorder %v1065, 127
        %v1108 = vsel %vm1107, %v1092, %v1100
        %v1109 = vsel %vm1107, %v1094, %v1102
        %v1110 = vsel %vm1107, %v1096, %v1104
        %v1111 = vsel %vm1107, %v1098, %v1106
        %v1112 = vsel %vm1107, %v1100, %v1092
        %v1113 = vsel %vm1107, %v1102, %v1094
        %v1114 = vsel %vm1107, %v1104, %v1096
        %v1115 = vsel %vm1107, %v1106, %v1098
        %1116 = vst [vmem:[#allocation3 + $0x80] sm:$0xff] %v1108
        %1117 = vst [vmem:[#allocation3 + $0x88] sm:$0xff] %v1112
        %1118 = vst [vmem:[#allocation3 + $0x90] sm:$0xff] %v1109
        %1119 = vst [vmem:[#allocation3 + $0x98] sm:$0xff] %v1113
        %1120 = vst [vmem:[#allocation3 + $0xa0] sm:$0xff] %v1110
        %1121 = vst [vmem:[#allocation3 + $0xa8] sm:$0xff] %v1114
        %1122 = vst [vmem:[#allocation3 + $0xb0] sm:$0xff] %v1111
        %1123 = vst [vmem:[#allocation3 + $0xb8] sm:$0xff] %v1115
        %v1124 = vld [vmem:[%s9] sm:$0xff]
        %v1125 = vld [vmem:[%s9 + $0x8] sm:$0xff]
        %v1126 = vld [vmem:[%s9 + $0x10] sm:$0xff]
        %v1127 = vld [vmem:[%s9 + $0x18] sm:$0xff]
        %v1128 = vld [vmem:[#allocation3] sm:$0xff]
        %v1129 = vld [vmem:[#allocation3 + $0x8] sm:$0xff]
        %v1130 = vld [vmem:[#allocation3 + $0x10] sm:$0xff]
        %v1131 = vld [vmem:[#allocation3 + $0x18] sm:$0xff]
        %v1132 = vld [vmem:[#allocation3 + $0x20] sm:$0xff]
        %v1133 = vld [vmem:[#allocation3 + $0x28] sm:$0xff]
        %v1134 = vld [vmem:[#allocation3 + $0x30] sm:$0xff]
        %v1135 = vld [vmem:[#allocation3 + $0x38] sm:$0xff]
        %v1136 = vld [vmem:[#allocation3 + $0x40] sm:$0xff]
        %v1137 = vld [vmem:[#allocation3 + $0x48] sm:$0xff]
        %v1138 = vld [vmem:[#allocation3 + $0x50] sm:$0xff]
        %v1139 = vld [vmem:[#allocation3 + $0x58] sm:$0xff]
        %v1140 = vld [vmem:[#allocation3 + $0x60] sm:$0xff]
        %v1141 = vld [vmem:[#allocation3 + $0x68] sm:$0xff]
        %v1142 = vld [vmem:[#allocation3 + $0x70] sm:$0xff]
        %v1143 = vld [vmem:[#allocation3 + $0x78] sm:$0xff]
        %v1144 = vld [vmem:[#allocation3 + $0x80] sm:$0xff]
        %v1145 = vld [vmem:[#allocation3 + $0x88] sm:$0xff]
        %v1146 = vld [vmem:[#allocation3 + $0x90] sm:$0xff]
        %v1147 = vld [vmem:[#allocation3 + $0x98] sm:$0xff]
        %v1148 = vld [vmem:[#allocation3 + $0xa0] sm:$0xff]
        %v1149 = vld [vmem:[#allocation3 + $0xa8] sm:$0xff]
        %v1150 = vld [vmem:[#allocation3 + $0xb0] sm:$0xff]
        %v1151 = vld [vmem:[#allocation3 + $0xb8] sm:$0xff]
        %v1152 = vld [vmem:[%s10] sm:$0xff]
        %v1153 = vld [vmem:[%s10 + $0x8] sm:$0xff]
        %v1154 = vld [vmem:[%s10 + $0x10] sm:$0xff]
        %v1155 = vld [vmem:[%s10 + $0x18] sm:$0xff]
        %1157 = vset.pattern.permute.xlu0 0
        %1158 = vperm.xlu0 %1157, %v1152
        %v1159 = vpop.permute.xlu0 %1158
        %1162 = vset.pattern.permute.xlu0 0
        %1163 = vperm.xlu0 %1162, %v1153
        %v1164 = vpop.permute.xlu0 %1163
        %1167 = vset.pattern.permute.xlu0 0
        %1168 = vperm.xlu0 %1167, %v1154
        %v1169 = vpop.permute.xlu0 %1168
        %1172 = vset.pattern.permute.xlu0 0
        %1173 = vperm.xlu0 %1172, %v1155
        %v1174 = vpop.permute.xlu0 %1173
        %v1177 = vsel %vm703, %v1124, 0
        %v1180 = vsel %vm703, %v1125, 0
        %v1183 = vsel %vm703, %v1126, 0
        %v1186 = vsel %vm703, %v1127, 0
        %1188 = vmatprep.subr.mxu0 %v1129
        %1189 = vmatpush1.msra.mxu0 %v1128
        %1190 = vmatprep.subr.mxu0 %v1131
        %1191 = vmatpush1.msra.mxu0 %v1130
        %1192 = vmatprep.subr.mxu0 %v1133
        %1193 = vmatpush1.msra.mxu0 %v1132
        %1194 = vmatprep.subr.mxu0 %v1135
        %1195 = vmatpush1.msra.mxu0 %v1134
        %1196 = vmatprep.subr.mxu0 %v1137
        %1197 = vmatpush1.msra.mxu0 %v1136
        %1198 = vmatprep.subr.mxu0 %v1139
        %1199 = vmatpush1.msra.mxu0 %v1138
        %1200 = vmatprep.subr.mxu0 %v1141
        %1201 = vmatpush1.msra.mxu0 %v1140
        %1202 = vmatprep.subr.mxu0 %v1143
        %1203 = vmatpush1.msra.mxu0 %v1142
        %1204 = vmatprep.subr.mxu0 %v1145
        %1205 = vmatpush1.msra.mxu0 %v1144
        %1206 = vmatprep.subr.mxu0 %v1147
        %1207 = vmatpush1.msra.mxu0 %v1146
        %1208 = vmatprep.subr.mxu0 %v1149
        %1209 = vmatpush1.msra.mxu0 %v1148
        %1210 = vmatprep.subr.mxu0 %v1151
        %1211 = vmatpush1.msra.mxu0 %v1150
        %1212 = vmatprep.subr.mxu0 0.0
        %1213 = vmatpush1.msra.mxu0 0.0
        %1214 = vmatprep.subr.mxu0 0.0
        %1215 = vmatpush1.msra.mxu0 0.0
        %1216 = vmatprep.subr.mxu0 0.0
        %1217 = vmatpush1.msra.mxu0 0.0
        %1218 = vmatprep.subr.mxu0 0.0
        %1219 = vmatpush1.msra.mxu0 0.0
        %1220 = vmatprep.subr.mxu0 0.0
        %1221 = vmatpush1.msra.mxu0 0.0
        %1222 = vmatprep.subr.mxu0 0.0
        %1223 = vmatpush1.msra.mxu0 0.0
        %1224 = vmatprep.subr.mxu0 0.0
        %1225 = vmatpush1.msra.mxu0 0.0
        %1226 = vmatprep.subr.mxu0 0.0
        %1227 = vmatpush1.msra.mxu0 0.0
        %1228 = vmatprep.subr.mxu0 0.0
        %1229 = vmatpush1.msra.mxu0 0.0
        %1230 = vmatprep.subr.mxu0 0.0
        %1231 = vmatpush1.msra.mxu0 0.0
        %1232 = vmatprep.subr.mxu0 0.0
        %1233 = vmatpush1.msra.mxu0 0.0
        %1234 = vmatprep.subr.mxu0 0.0
        %1235 = vmatpush1.msra.mxu0 0.0
        %1236 = vmatprep.subr.mxu0 0.0
        %1237 = vmatpush1.msra.mxu0 0.0
        %1238 = vmatprep.subr.mxu0 0.0
        %1239 = vmatpush1.msra.mxu0 0.0
        %1240 = vmatprep.subr.mxu0 0.0
        %1241 = vmatpush1.msra.mxu0 0.0
        %1242 = vmatprep.subr.mxu0 0.0
        %1243 = vmatpush1.msra.mxu0 0.0
        %1244 = vmatprep.subr.mxu0 0.0
        %1245 = vmatpush1.msra.mxu0 0.0
        %1246 = vmatprep.subr.mxu0 0.0
        %1247 = vmatpush1.msra.mxu0 0.0
        %1248 = vmatprep.subr.mxu0 0.0
        %1249 = vmatpush1.msra.mxu0 0.0
        %1250 = vmatprep.subr.mxu0 0.0
        %1251 = vmatpush1.msra.mxu0 0.0
        %1252 = vmatprep.mubr.f32.mxu0 0.0
        %1253 = vmatmul.mubr.f32.gmra.mrb[0].mxu0 %v1177
        %v1254 = vpop.f32.mrb[0].mxu0
        %v1255 = vadd.f32 %v1159, %v1254
        %v1256 = vpop.f32.mrb[0].mxu0
        %v1257 = vadd.f32 %v1159, %v1256
        %1258 = vmatprep.mubr.f32.mxu0 0.0
        %1259 = vmatmul.mubr.f32.gmra.mrb[0].mxu0 %v1180
        %v1260 = vpop.f32.mrb[0].mxu0
        %v1261 = vadd.f32 %v1164, %v1260
        %v1262 = vpop.f32.mrb[0].mxu0
        %v1263 = vadd.f32 %v1164, %v1262
        %1264 = vmatprep.mubr.f32.mxu0 0.0
        %1265 = vmatmul.mubr.f32.gmra.mrb[0].mxu0 %v1183
        %v1266 = vpop.f32.mrb[0].mxu0
        %v1267 = vadd.f32 %v1169, %v1266
        %v1268 = vpop.f32.mrb[0].mxu0
        %v1269 = vadd.f32 %v1169, %v1268
        %1270 = vmatprep.mubr.f32.mxu0 0.0
        %1271 = vmatmul.mubr.f32.gmra.mrb[0].mxu0 %v1186
        %v1272 = vpop.f32.mrb[0].mxu0
        %v1273 = vadd.f32 %v1174, %v1272
        %v1274 = vpop.f32.mrb[0].mxu0
        %v1275 = vadd.f32 %v1174, %v1274
        %1276 = vdwg.mxu0
        %v1277 = vld [vmem:[#allocation4] sm:$0xff]
        %v1278 = vld [vmem:[#allocation4 + $0x8] sm:$0xff]
        %v1279 = vld [vmem:[#allocation4 + $0x10] sm:$0xff]
        %v1280 = vld [vmem:[#allocation4 + $0x18] sm:$0xff]
        %v1281 = vld [vmem:[#allocation4 + $0x20] sm:$0xff]
        %v1282 = vld [vmem:[#allocation4 + $0x28] sm:$0xff]
        %v1283 = vld [vmem:[#allocation4 + $0x30] sm:$0xff]
        %v1284 = vld [vmem:[#allocation4 + $0x38] sm:$0xff]
        %v1285 = vadd.f32 %v1277, %v1255
        %v1286 = vadd.f32 %v1278, %v1257
        %v1287 = vadd.f32 %v1279, %v1261
        %v1288 = vadd.f32 %v1280, %v1263
        %v1289 = vadd.f32 %v1281, %v1267
        %v1290 = vadd.f32 %v1282, %v1269
        %v1291 = vadd.f32 %v1283, %v1273
        %v1292 = vadd.f32 %v1284, %v1275
        %v1293 = vmul.f32 %v1285, %v1033
        %v1294 = vmul.f32 %v1286, %v1037
        %v1295 = vmul.f32 %v1287, %v1033
        %v1296 = vmul.f32 %v1288, %v1037
        %v1297 = vmul.f32 %v1289, %v1033
        %v1298 = vmul.f32 %v1290, %v1037
        %v1299 = vmul.f32 %v1291, %v1033
        %v1300 = vmul.f32 %v1292, %v1037
        %1301 = vrot.lane.b32.xlu0 %v1293, 1
        %v1302 = vpop.permute.xlu0 %1301
        %1303 = vrot.lane.b32.xlu0 %v1295, 1
        %v1304 = vpop.permute.xlu0 %1303
        %1305 = vrot.lane.b32.xlu0 %v1297, 1
        %v1306 = vpop.permute.xlu0 %1305
        %1307 = vrot.lane.b32.xlu0 %v1299, 1
        %v1308 = vpop.permute.xlu0 %1307
        %1309 = vrot.lane.b32.xlu0 %v1294, 1
        %v1310 = vpop.permute.xlu0 %1309
        %1311 = vrot.lane.b32.xlu0 %v1296, 1
        %v1312 = vpop.permute.xlu0 %1311
        %1313 = vrot.lane.b32.xlu0 %v1298, 1
        %v1314 = vpop.permute.xlu0 %1313
        %1315 = vrot.lane.b32.xlu0 %v1300, 1
        %v1316 = vpop.permute.xlu0 %1315
        %v1317 = vsel %vm1066, %v1302, %v1310
        %v1318 = vsel %vm1066, %v1304, %v1312
        %v1319 = vsel %vm1066, %v1306, %v1314
        %v1320 = vsel %vm1066, %v1308, %v1316
        %v1321 = vsel %vm1066, %v1310, %v1302
        %v1322 = vsel %vm1066, %v1312, %v1304
        %v1323 = vsel %vm1066, %v1314, %v1306
        %v1324 = vsel %vm1066, %v1316, %v1308
        %1325 = vst [vmem:[#allocation3] sm:$0xff] %v1321
        %1326 = vst [vmem:[#allocation3 + $0x8] sm:$0xff] %v1317
        %1327 = vst [vmem:[#allocation3 + $0x10] sm:$0xff] %v1322
        %1328 = vst [vmem:[#allocation3 + $0x18] sm:$0xff] %v1318
        %1329 = vst [vmem:[#allocation3 + $0x20] sm:$0xff] %v1323
        %1330 = vst [vmem:[#allocation3 + $0x28] sm:$0xff] %v1319
        %1331 = vst [vmem:[#allocation3 + $0x30] sm:$0xff] %v1324
        %1332 = vst [vmem:[#allocation3 + $0x38] sm:$0xff] %v1320
        %1333 = vst [vmem:[#allocation3 + $0x40] sm:$0xff] %v1293
        %1334 = vst [vmem:[#allocation3 + $0x48] sm:$0xff] %v1294
        %1335 = vst [vmem:[#allocation3 + $0x50] sm:$0xff] %v1295
        %1336 = vst [vmem:[#allocation3 + $0x58] sm:$0xff] %v1296
        %1337 = vst [vmem:[#allocation3 + $0x60] sm:$0xff] %v1297
        %1338 = vst [vmem:[#allocation3 + $0x68] sm:$0xff] %v1298
        %1339 = vst [vmem:[#allocation3 + $0x70] sm:$0xff] %v1299
        %1340 = vst [vmem:[#allocation3 + $0x78] sm:$0xff] %v1300
        %1341 = vrot.lane.b32.xlu0 %v1293, 127
        %v1342 = vpop.permute.xlu0 %1341
        %1343 = vrot.lane.b32.xlu0 %v1295, 127
        %v1344 = vpop.permute.xlu0 %1343
        %1345 = vrot.lane.b32.xlu0 %v1297, 127
        %v1346 = vpop.permute.xlu0 %1345
        %1347 = vrot.lane.b32.xlu0 %v1299, 127
        %v1348 = vpop.permute.xlu0 %1347
        %1349 = vrot.lane.b32.xlu0 %v1294, 127
        %v1350 = vpop.permute.xlu0 %1349
        %1351 = vrot.lane.b32.xlu0 %v1296, 127
        %v1352 = vpop.permute.xlu0 %1351
        %1353 = vrot.lane.b32.xlu0 %v1298, 127
        %v1354 = vpop.permute.xlu0 %1353
        %1355 = vrot.lane.b32.xlu0 %v1300, 127
        %v1356 = vpop.permute.xlu0 %1355
        %v1357 = vsel %vm1107, %v1342, %v1350
        %v1358 = vsel %vm1107, %v1344, %v1352
        %v1359 = vsel %vm1107, %v1346, %v1354
        %v1360 = vsel %vm1107, %v1348, %v1356
        %v1361 = vsel %vm1107, %v1350, %v1342
        %v1362 = vsel %vm1107, %v1352, %v1344
        %v1363 = vsel %vm1107, %v1354, %v1346
        %v1364 = vsel %vm1107, %v1356, %v1348
        %1365 = vst [vmem:[#allocation3 + $0x80] sm:$0xff] %v1357
        %1366 = vst [vmem:[#allocation3 + $0x88] sm:$0xff] %v1361
        %1367 = vst [vmem:[#allocation3 + $0x90] sm:$0xff] %v1358
        %1368 = vst [vmem:[#allocation3 + $0x98] sm:$0xff] %v1362
        %1369 = vst [vmem:[#allocation3 + $0xa0] sm:$0xff] %v1359
        %1370 = vst [vmem:[#allocation3 + $0xa8] sm:$0xff] %v1363
        %1371 = vst [vmem:[#allocation3 + $0xb0] sm:$0xff] %v1360
        %1372 = vst [vmem:[#allocation3 + $0xb8] sm:$0xff] %v1364
        %v1373 = vld [vmem:[%s11] sm:$0x1]
        %v1374 = vld [vmem:[#allocation3] sm:$0xff]
        %v1375 = vld [vmem:[#allocation3 + $0x8] sm:$0xff]
        %v1376 = vld [vmem:[#allocation3 + $0x10] sm:$0xff]
        %v1377 = vld [vmem:[#allocation3 + $0x18] sm:$0xff]
        %v1378 = vld [vmem:[#allocation3 + $0x20] sm:$0xff]
        %v1379 = vld [vmem:[#allocation3 + $0x28] sm:$0xff]
        %v1380 = vld [vmem:[#allocation3 + $0x30] sm:$0xff]
        %v1381 = vld [vmem:[#allocation3 + $0x38] sm:$0xff]
        %v1382 = vld [vmem:[#allocation3 + $0x40] sm:$0xff]
        %v1383 = vld [vmem:[#allocation3 + $0x48] sm:$0xff]
        %v1384 = vld [vmem:[#allocation3 + $0x50] sm:$0xff]
        %v1385 = vld [vmem:[#allocation3 + $0x58] sm:$0xff]
        %v1386 = vld [vmem:[#allocation3 + $0x60] sm:$0xff]
        %v1387 = vld [vmem:[#allocation3 + $0x68] sm:$0xff]
        %v1388 = vld [vmem:[#allocation3 + $0x70] sm:$0xff]
        %v1389 = vld [vmem:[#allocation3 + $0x78] sm:$0xff]
        %v1390 = vld [vmem:[#allocation3 + $0x80] sm:$0xff]
        %v1391 = vld [vmem:[#allocation3 + $0x88] sm:$0xff]
        %v1392 = vld [vmem:[#allocation3 + $0x90] sm:$0xff]
        %v1393 = vld [vmem:[#allocation3 + $0x98] sm:$0xff]
        %v1394 = vld [vmem:[#allocation3 + $0xa0] sm:$0xff]
        %v1395 = vld [vmem:[#allocation3 + $0xa8] sm:$0xff]
        %v1396 = vld [vmem:[#allocation3 + $0xb0] sm:$0xff]
        %v1397 = vld [vmem:[#allocation3 + $0xb8] sm:$0xff]
        %v1398 = vld [vmem:[#allocation5] sm:$0x1]
        %1400 = vset.pattern.permute.xlu0 0
        %1401 = vperm.xlu0 %1400, %v1398
        %v1402 = vpop.permute.xlu0 %1401
        %v1404 = vlaneseq
        %v1405 = vshrl.u32 %v1404, 7
        %v1406 = vsub.s32 0, %v1405
        %v1407 = vrot.slane %v1402, %v1406
        %v1409 = vsel %vm703, %v1373, 0
        %1411 = vmatprep.subr.mxu0 %v1375
        %1412 = vmatpush1.msra.mxu0 %v1374
        %1413 = vmatprep.subr.mxu0 %v1377
        %1414 = vmatpush1.msra.mxu0 %v1376
        %1415 = vmatprep.subr.mxu0 %v1379
        %1416 = vmatpush1.msra.mxu0 %v1378
        %1417 = vmatprep.subr.mxu0 %v1381
        %1418 = vmatpush1.msra.mxu0 %v1380
        %1419 = vmatprep.subr.mxu0 %v1383
        %1420 = vmatpush1.msra.mxu0 %v1382
        %1421 = vmatprep.subr.mxu0 %v1385
        %1422 = vmatpush1.msra.mxu0 %v1384
        %1423 = vmatprep.subr.mxu0 %v1387
        %1424 = vmatpush1.msra.mxu0 %v1386
        %1425 = vmatprep.subr.mxu0 %v1389
        %1426 = vmatpush1.msra.mxu0 %v1388
        %1427 = vmatprep.subr.mxu0 %v1391
        %1428 = vmatpush1.msra.mxu0 %v1390
        %1429 = vmatprep.subr.mxu0 %v1393
        %1430 = vmatpush1.msra.mxu0 %v1392
        %1431 = vmatprep.subr.mxu0 %v1395
        %1432 = vmatpush1.msra.mxu0 %v1394
        %1433 = vmatprep.subr.mxu0 %v1397
        %1434 = vmatpush1.msra.mxu0 %v1396
        %1435 = vmatprep.subr.mxu0 0.0
        %1436 = vmatpush1.msra.mxu0 0.0
        %1437 = vmatprep.subr.mxu0 0.0
        %1438 = vmatpush1.msra.mxu0 0.0
        %1439 = vmatprep.subr.mxu0 0.0
        %1440 = vmatpush1.msra.mxu0 0.0
        %1441 = vmatprep.subr.mxu0 0.0
        %1442 = vmatpush1.msra.mxu0 0.0
        %1443 = vmatprep.subr.mxu0 0.0
        %1444 = vmatpush1.msra.mxu0 0.0
        %1445 = vmatprep.subr.mxu0 0.0
        %1446 = vmatpush1.msra.mxu0 0.0
        %1447 = vmatprep.subr.mxu0 0.0
        %1448 = vmatpush1.msra.mxu0 0.0
        %1449 = vmatprep.subr.mxu0 0.0
        %1450 = vmatpush1.msra.mxu0 0.0
        %1451 = vmatprep.subr.mxu0 0.0
        %1452 = vmatpush1.msra.mxu0 0.0
        %1453 = vmatprep.subr.mxu0 0.0
        %1454 = vmatpush1.msra.mxu0 0.0
        %1455 = vmatprep.subr.mxu0 0.0
        %1456 = vmatpush1.msra.mxu0 0.0
        %1457 = vmatprep.subr.mxu0 0.0
        %1458 = vmatpush1.msra.mxu0 0.0
        %1459 = vmatprep.subr.mxu0 0.0
        %1460 = vmatpush1.msra.mxu0 0.0
        %1461 = vmatprep.subr.mxu0 0.0
        %1462 = vmatpush1.msra.mxu0 0.0
        %1463 = vmatprep.subr.mxu0 0.0
        %1464 = vmatpush1.msra.mxu0 0.0
        %1465 = vmatprep.subr.mxu0 0.0
        %1466 = vmatpush1.msra.mxu0 0.0
        %1467 = vmatprep.subr.mxu0 0.0
        %1468 = vmatpush1.msra.mxu0 0.0
        %1469 = vmatprep.subr.mxu0 0.0
        %1470 = vmatpush1.msra.mxu0 0.0
        %1471 = vmatprep.subr.mxu0 0.0
        %1472 = vmatpush1.msra.mxu0 0.0
        %1473 = vmatprep.subr.mxu0 0.0
        %1474 = vmatpush1.msra.mxu0 0.0
        %1475 = vmatprep.mubr.f32.mxu0 0.0
        %1476 = vmatmul.mubr.f32.gmra.mrb[0].mxu0 %v1409
        %v1477 = vpop.f32.mrb[0].mxu0
        %v1478 = vadd.f32 %v1407, %v1477
        %v1479 = vpop.f32.mrb[0].mxu0
        %v1480 = vadd.f32 %v1407, %v1479
        %1481 = vdwg.mxu0
        %v1482 = vmul.f32 %v1478, %v1033
        %v1483 = vmul.f32 %v1480, %v1037
        %v1484 = vld [vmem:[#allocation6] sm:$0x1]
        %1486 = vset.pattern.permute.xlu0 0
        %1487 = vperm.xlu0 %1486, %v1484
        %v1488 = vpop.permute.xlu0 %1487
        %v1490 = vlaneseq
        %v1491 = vshrl.u32 %v1490, 7
        %v1492 = vsub.s32 0, %v1491
        %v1493 = vrot.slane %v1488, %v1492
        %v1494 = vadd.f32 %v1482, %v1493
        %v1495 = vadd.f32 %v1483, %v1493
        %v1496 = vxor.u32 %v1494, 2147483648
        %v1497 = vxor.u32 %v1495, 2147483648
        %v1498 = vmul.f32 %v1496, 1.442695
        %v1499 = vpow.pop %v1498
        %v1500 = vmul.f32 %v1497, 1.442695
        %v1501 = vpow.pop %v1500
        %v1502 = vadd.f32 %v1499, 1.0
        %v1503 = vadd.f32 %v1501, 1.0
        %v1504 = vrcp.pop %v1502
        %v1505 = vmul.f32 1.0, %v1504
        %v1506 = vrcp.pop %v1503
        %v1507 = vmul.f32 1.0, %v1506
        %v1510 = vcombine.low %v1505, %v1507
        %v1512 = vunpack.c.l.s4 1966171168
        %v1513 = vunpack.c.0.s8 %v1512
        %v1514 = vlaneseq
        %v1515 = vshrl.u32 %v1514, 7
        %v1516 = vsub.s32 %v1513, %v1515
        %v1517 = vrot.slane %v1510, %v1516
        %v1519 = vunpack.c.l.s4 1966171168
        %v1520 = vunpack.c.0.s8 %v1519
        %v1521 = vlaneseq
        %v1522 = vshrl.u32 %v1521, 7
        %v1523 = vsub.s32 %v1520, %v1522
        %v1524 = vrot.slane %v1517, %v1523
        %v1526 = vlaneseq
        %vm1527 = vcmp.ge.s32.totalorder %v1526, 0
        %vm1528 = vcmp.lt.s32.totalorder %v1526, 256
        %vm1529 = vmand %vm1527, %vm1528
        %1530 = vst.msk [vmem:[%s475] sm:$0x3] %vm1529, %v1524
        %s1531 = sand.u32 %s344, 1
        %s1532 = scalar_lea.sflag [#allocation8], %s1531
        %s1533 = sand.u32 %s344, 1
        %s1534 = smul.addr %s1533, 2
        %s1535 = scalar_lea.vmem [#allocation7], %s1534
        // Predicated region
        $region77: #{tpu_custom_call.1} parent=75 // pred_check
          %p1536 = pneg %p354
        $region78: #{tpu_custom_call.1} parent=75 // pred_check_branch
          %1538 = sbr.rel (%p1536) target = $region80
        $region79: #{tpu_custom_call.1} parent=75 // pred_region
          %s1540 = ssub.s32 32, 32
          %1541 = vsyncadd %s1532, %s1540
          %s1542 = smul.addr %s32, 2
          %s1543 = smul.addr %s1542, 16
          %s1544 = scalar_lea.hbm %s14, %s1543
          %s1546 = sshll.u32 %s1535, 4
          %s1547 = int_to_ptr.vmem [resolvable:$true] %s1546
          %1549 = dma.vmem_to_hbm [thread:$0]  %s1547, 32, %s1544, %s1532
        $region80: #{tpu_custom_call.1} parent=75 // pred_fallthru
          _
      $region76: #{tpu_custom_call.1} parent=5 // pred_fallthru
        _
      %p1550 = scmp.le.s32.totalorder 2, %s27
      // Predicated region
      $region81: #{tpu_custom_call.1} parent=5 // pred_check
        %p1551 = pneg %p1550
      $region82: #{tpu_custom_call.1} parent=5 // pred_check_branch
        %1553 = sbr.rel (%p1551) target = $region84
      $region83: #{tpu_custom_call.1} parent=5 // pred_region
        %s1554 = ssub.s32 %s27, 2
        // Predicated region
        $region85: #{tpu_custom_call.1} parent=83 // pred_check
          %p1555 = pneg %p360
        $region86: #{tpu_custom_call.1} parent=83 // pred_check_branch
          %1557 = sbr.rel (%p1555) target = $region88
        $region87: #{tpu_custom_call.1} parent=83 // pred_region
          %s1558 = sand.u32 %s345, 1
          %s1559 = scalar_lea.sflag [#allocation8], %s1558
          %s1560 = sand.u32 %s345, 1
          %s1561 = smul.addr %s1560, 2
          %s1562 = scalar_lea.vmem [#allocation7], %s1561
          %1563 = dma.done %s1559, 32
        $region88: #{tpu_custom_call.1} parent=83 // pred_fallthru
          _
      $region84: #{tpu_custom_call.1} parent=5 // pred_fallthru
        _
    $region6: #{tpu_custom_call.1} parent=1 // loop_footer
      %s31 = sadd.s32 1, %s27
    $region7: #{tpu_custom_call.1} parent=1 // loop_footer_branch
      %26 = sbr.rel target = $region3
    $region8: #{tpu_custom_call.1} parent=1 // loop_exit
      _
    %1564 = vsyncpa [#allocation8], 1
    %s1565 = scalar_lea.sflag [#allocation8], 1
    %1566 = vsyncpa %s1565, 1

</llo_original>
